<compile_context>
chip_gen: v6e
topology: v6e:2x2x1
jax: 0.10.0
libtpu: 0.0.40
codegen_flags: <defaults>
</compile_context>

<pallas_src>
import math
from functools import partial

import jax
import jax.numpy as jnp
from jax import lax
from jax.experimental import pallas as pl
from jax.experimental.pallas import tpu as pltpu

LOG_STD_MAX = 2.0
LOG_STD_MIN = -10.0
_HALF_LOG_2PI = 0.5 * math.log(2.0 * math.pi)

_OUT_LANES = 128  # lane-dense padded output slab width for the fused head


def _vmem_spec():
    # Whole array resident in VMEM: no block_shape / index_map, no double-buffering.
    return pl.BlockSpec(memory_space=pltpu.MemorySpace.VMEM)


# ----------------------------------------------------------------------------
# Kernel 1: conv1 GEMM + in-kernel conv2 im2col + conv2 GEMM
# ----------------------------------------------------------------------------
def _conv_encoder_kernel(cols1_ref, w1_ref, b1_ref, w2_ref, b2_ref,
                         o_ref, h1_ref, *, B, H1, W1, K, H2, W2):
    # conv1 as GEMM: rows = (b, oh1, ow1), lanes = channels.
    h1 = jnp.dot(cols1_ref[...], w1_ref[...], preferred_element_type=jnp.float32)
    h1 = jnp.maximum(h1 + b1_ref[...], 0.0)            # [B*H1*W1, C1]
    h1_ref[...] = h1                                    # conv1 output stays in VMEM scratch

    # conv2 im2col gathered in-kernel with static slices (fully unrolled, tiny extents).
    # Inner column ordering is (ki, kj, c), matching w2's row ordering.
    blocks = []
    for b in range(B):
        base = b * H1 * W1
        for oh in range(H2):
            row_patches = [
                h1_ref[pl.ds(base + (oh + ki) * W1 + kj, W2), :]
                for ki in range(K)
                for kj in range(K)
            ]                                           # each: [W2, C1]
            blocks.append(jnp.concatenate(row_patches, axis=-1))   # [W2, K*K*C1]
    cols2 = jnp.concatenate(blocks, axis=0)             # [B*H2*W2, K*K*C1]

    h2 = jnp.dot(cols2, w2_ref[...], preferred_element_type=jnp.float32)
    o_ref[...] = jnp.maximum(h2 + b2_ref[...], 0.0)     # [B*H2*W2, C2]


def conv_encoder_pallas(cols1, w1, b1, w2, b2, *, B, H1, W1, K, H2, W2):
    cout = w2.shape[1]
    n_rows = B * H2 * W2
    flops = (2 * cols1.shape[0] * cols1.shape[1] * w1.shape[1]
             + 2 * n_rows * w2.shape[0] * cout)
    bytes_accessed = 4 * (cols1.size + w1.size + b1.size + w2.size + b2.size
                          + n_rows * cout)
    return pl.pallas_call(
        partial(_conv_encoder_kernel, B=B, H1=H1, W1=W1, K=K, H2=H2, W2=W2),
        in_specs=[_vmem_spec() for _ in range(5)],
        out_specs=_vmem_spec(),
        out_shape=jax.ShapeDtypeStruct((n_rows, cout), jnp.float32),
        scratch_shapes=[pltpu.VMEM((B * H1 * W1, w1.shape[1]), jnp.float32)],
        cost_estimate=pl.CostEstimate(flops=int(flops), transcendentals=0,
                                      bytes_accessed=int(bytes_accessed)),
    )(cols1, w1, b1, w2, b2)


# ----------------------------------------------------------------------------
# Kernel 2: encoder head + actor MLP + mean/logstd heads + sample + log-prob
# ----------------------------------------------------------------------------
def _actor_head_kernel(flat_ref, encw_ref, encb_ref, g_ref, beta_ref,
                       w1_ref, b1_ref, w2_ref, b2_ref,
                       wm_ref, bm_ref, ws_ref, bs_ref,
                       eps_ref, scale_ref, bias_ref, o_ref, *, action_dim):
    # Encoder head: Linear -> LayerNorm(eps=1e-5) -> tanh
    y = jnp.dot(flat_ref[...], encw_ref[...], preferred_element_type=jnp.float32)
    y = y + encb_ref[...]
    mu = jnp.mean(y, axis=-1, keepdims=True)
    var = jnp.mean((y - mu) ** 2, axis=-1, keepdims=True)
    y = (y - mu) * lax.rsqrt(var + 1e-5)
    feat = jnp.tanh(y * g_ref[...] + beta_ref[...])

    # Actor MLP: Linear + ReLU, Linear + ReLU
    x = jnp.dot(feat, w1_ref[...], preferred_element_type=jnp.float32) + b1_ref[...]
    x = jnp.maximum(x, 0.0)
    x = jnp.dot(x, w2_ref[...], preferred_element_type=jnp.float32) + b2_ref[...]
    x = jnp.maximum(x, 0.0)

    # Heads: fc_mean / fc_logstd, tanh log-std squashing
    mean = jnp.dot(x, wm_ref[...], preferred_element_type=jnp.float32) + bm_ref[...]
    log_std = jnp.dot(x, ws_ref[...], preferred_element_type=jnp.float32) + bs_ref[...]
    log_std = jnp.tanh(log_std)
    log_std = LOG_STD_MIN + 0.5 * (LOG_STD_MAX - LOG_STD_MIN) * (log_std + 1.0)
    std = jnp.exp(log_std)

    # Normal(mean, std).rsample() with externally supplied eps; tanh squash + rescale.
    eps = eps_ref[...]
    x_t = mean + std * eps
    y_t = jnp.tanh(x_t)
    scale = scale_ref[...]
    action = y_t * scale + bias_ref[...]

    # Normal.log_prob(x_t): (x_t - mean)/std == eps
    log_prob = -0.5 * eps * eps - log_std - _HALF_LOG_2PI
    log_prob = log_prob - jnp.log(scale * (1.0 - y_t * y_t) + 1e-6)
    logp = jnp.sum(log_prob, axis=-1, keepdims=True)

    # Single lane-dense (B, 128) store: [action | log_prob | zeros]
    Bsz = action.shape[0]
    pad = o_ref.shape[1] - action_dim - 1
    o_ref[...] = jnp.concatenate(
        [action, logp, jnp.zeros((Bsz, pad), jnp.float32)], axis=-1)


def actor_head_pallas(flat, encw, encb, ln_g, ln_b, w1, b1, w2, b2,
                      wm, bm, ws, bs, eps, scale, bias):
    B = flat.shape[0]
    A = wm.shape[1]
    assert A + 1 <= _OUT_LANES
    args = (flat, encw, encb, ln_g, ln_b, w1, b1, w2, b2,
            wm, bm, ws, bs, eps, scale, bias)
    flops = 2 * B * (encw.shape[0] * encw.shape[1]
                     + w1.shape[0] * w1.shape[1]
                     + w2.shape[0] * w2.shape[1]
                     + 2 * wm.shape[0] * A)
    transcendentals = B * (encw.shape[1] + 6 * A)
    bytes_accessed = 4 * (sum(int(a.size) for a in args) + B * _OUT_LANES)
    out = pl.pallas_call(
        partial(_actor_head_kernel, action_dim=A),
        in_specs=[_vmem_spec() for _ in range(len(args))],
        out_specs=_vmem_spec(),
        out_shape=jax.ShapeDtypeStruct((B, _OUT_LANES), jnp.float32),
        cost_estimate=pl.CostEstimate(flops=int(flops),
                                      transcendentals=int(transcendentals),
                                      bytes_accessed=int(bytes_accessed)),
    )(*args)
    return out[:, :A], out[:, A:A + 1]


# ----------------------------------------------------------------------------
# conv1 im2col glue (plain JAX, runs once on the raw observation only)
# ----------------------------------------------------------------------------
def _im2col_conv1(x_nchw, k, stride):
    # x: [B, C, H, W] -> cols: [B*Ho*Wo, k*k*C] with (ki, kj, c) inner ordering,
    # rows ordered (b, oh, ow) (channels-last downstream, no further transposes).
    B, C, H, W = x_nchw.shape
    Ho = (H - k) // stride + 1
    Wo = (W - k) // stride + 1
    patches = []
    for i in range(k):
        for j in range(k):
            patches.append(
                x_nchw[:, :,
                       i:i + stride * (Ho - 1) + 1:stride,
                       j:j + stride * (Wo - 1) + 1:stride])   # [B, C, Ho, Wo]
    cols = jnp.stack(patches, axis=1)                          # [B, k*k, C, Ho, Wo]
    cols = cols.transpose(0, 3, 4, 1, 2)                       # [B, Ho, Wo, k*k, C]
    return cols.reshape(B * Ho * Wo, k * k * C), Ho, Wo


# ----------------------------------------------------------------------------
# Parameters (deterministic synthetic init; shapes follow the module's __init__)
# ----------------------------------------------------------------------------
def init_params(key, in_channels, action_dim, hidden_size, feature_dim,
                conv_channels, flatten_dim, action_low=-1.0, action_high=1.0):
    ks = jax.random.split(key, 8)

    def lin(k, fan_in, fan_out):
        w = jax.random.normal(k, (fan_in, fan_out), jnp.float32) / jnp.sqrt(
            jnp.float32(fan_in))
        b = jnp.zeros((1, fan_out), jnp.float32)
        return w, b

    # SAC-AE style CNN encoder (reduced depth for the small 16x16 test input):
    # conv(3x3, stride 2) -> ReLU -> conv(3x3, stride 1) -> ReLU -> flatten
    #   -> Linear(feature_dim) -> LayerNorm -> tanh
    # Conv weights are stored pre-flattened with (ki, kj, c) row ordering and
    # enc_fc_w rows follow the NHWC (oh, ow, c) flatten order (free reorder at init).
    conv1_w, conv1_b = lin(ks[0], in_channels * 9, conv_channels)
    conv2_w, conv2_b = lin(ks[1], conv_channels * 9, conv_channels)
    enc_fc_w, enc_fc_b = lin(ks[2], flatten_dim, feature_dim)
    mlp_w1, mlp_b1 = lin(ks[3], feature_dim, hidden_size)
    mlp_w2, mlp_b2 = lin(ks[4], hidden_size, hidden_size)
    mean_w, mean_b = lin(ks[5], hidden_size, action_dim)
    logstd_w, logstd_b = lin(ks[6], hidden_size, action_dim)

    return dict(
        conv1_w=conv1_w, conv1_b=conv1_b,
        conv2_w=conv2_w, conv2_b=conv2_b,
        enc_fc_w=enc_fc_w, enc_fc_b=enc_fc_b,
        ln_g=jnp.ones((1, feature_dim), jnp.float32),
        ln_b=jnp.zeros((1, feature_dim), jnp.float32),
        mlp_w1=mlp_w1, mlp_b1=mlp_b1,
        mlp_w2=mlp_w2, mlp_b2=mlp_b2,
        mean_w=mean_w, mean_b=mean_b,
        logstd_w=logstd_w, logstd_b=logstd_b,
        action_scale=jnp.full((1, action_dim), (action_high - action_low) / 2.0,
                              jnp.float32),
        action_bias=jnp.full((1, action_dim), (action_high + action_low) / 2.0,
                             jnp.float32),
    )


# ----------------------------------------------------------------------------
# Full forward pass (== SACAEContinuousActor.forward)
# ----------------------------------------------------------------------------
def sac_ae_actor_forward(params, obs, eps):
    # TODO(synk): detach_encoder_features is a gradient-only flag (stop_gradient);
    # it has no effect on the forward values computed here.
    B = obs.shape[0]
    k = 3
    cols1, H1, W1 = _im2col_conv1(obs, k=k, stride=2)
    H2, W2 = H1 - k + 1, W1 - k + 1                      # conv2 is 3x3, stride 1

    h2 = conv_encoder_pallas(cols1, params["conv1_w"], params["conv1_b"],
                             params["conv2_w"], params["conv2_b"],
                             B=B, H1=H1, W1=W1, K=k, H2=H2, W2=W2)
    flat = h2.reshape(B, -1)       # rows already (b, oh, ow): NHWC flatten, trivial reshape

    action, log_prob = actor_head_pallas(
        flat, params["enc_fc_w"], params["enc_fc_b"], params["ln_g"], params["ln_b"],
        params["mlp_w1"], params["mlp_b1"], params["mlp_w2"], params["mlp_b2"],
        params["mean_w"], params["mean_b"], params["logstd_w"], params["logstd_b"],
        eps, params["action_scale"], params["action_bias"])
    return action, log_prob


if __name__ == "__main__":
    # Small shapes consistent with the module's forward:
    B, C, H, W = 2, 4, 16, 16
    action_dim = 6
    hidden_size = 256          # module default is 1024; reduced for the test
    feature_dim = 50           # SAC-AE encoder output_dim
    conv_channels = 32
    # spatial: 16 -(3,s2)-> 7 -(3,s1)-> 5  => flatten = 32 * 5 * 5
    flatten_dim = conv_channels * 5 * 5

    root = jax.random.PRNGKey(0)
    k_obs, k_eps, k_par = jax.random.split(root, 3)

    obs = jax.random.normal(k_obs, (B, C, H, W), jnp.float32)
    eps = jax.random.normal(k_eps, (B, action_dim), jnp.float32)  # Normal.rsample noise
    params = init_params(k_par, C, action_dim, hidden_size, feature_dim,
                         conv_channels, flatten_dim)

    fwd = jax.jit(sac_ae_actor_forward)
    action, log_prob = fwd(params, obs, eps)
    jax.block_until_ready((action, log_prob))

    assert action.shape == (B, action_dim) and log_prob.shape == (B, 1)
    assert bool(jnp.all(jnp.isfinite(action))) and bool(jnp.all(jnp.isfinite(log_prob)))
    print("KERNEL_OK")
</pallas_src>

<mosaic_0001>
module attributes {stable_mosaic.version = 11 : i64} {
  func.func @_conv_encoder_kernel(%arg0: memref<98x36xf32, #tpu.memory_space<vmem>>, %arg1: memref<36x32xf32, #tpu.memory_space<vmem>>, %arg2: memref<1x32xf32, #tpu.memory_space<vmem>>, %arg3: memref<288x32xf32, #tpu.memory_space<vmem>>, %arg4: memref<1x32xf32, #tpu.memory_space<vmem>>, %arg5: memref<50x32xf32, #tpu.memory_space<vmem>>, %arg6: memref<98x32xf32, #tpu.memory_space<vmem>>) attributes {dimension_semantics = [], scalar_prefetch = 0 : i64, scratch_operands = 1 : i64, tpu.core_type = #tpu.core_type<tc>} {
    %c0 = arith.constant 0 : index
    %c0_0 = arith.constant 0 : index
    %0 = vector.load %arg0[%c0, %c0_0] : memref<98x36xf32, #tpu.memory_space<vmem>>, vector<98x36xf32>
    %c0_1 = arith.constant 0 : index
    %c0_2 = arith.constant 0 : index
    %1 = vector.load %arg1[%c0_1, %c0_2] : memref<36x32xf32, #tpu.memory_space<vmem>>, vector<36x32xf32>
    %cst = arith.constant dense<0.000000e+00> : vector<98x32xf32>
    %2 = tpu.matmul %0, %1, %cst {dimension_numbers = #tpu.dot_dimension_numbers<[1], [0], [0], [1], [0, 0, 1, 1], [], []>} : vector<98x36xf32>, vector<36x32xf32>, vector<98x32xf32> -> vector<98x32xf32>
    %c0_3 = arith.constant 0 : index
    %c0_4 = arith.constant 0 : index
    %3 = vector.load %arg2[%c0_3, %c0_4] : memref<1x32xf32, #tpu.memory_space<vmem>>, vector<1x32xf32>
    %4 = vector.broadcast %3 : vector<1x32xf32> to vector<98x32xf32>
    %5 = arith.addf %2, %4 : vector<98x32xf32>
    %cst_5 = arith.constant 0.000000e+00 : f32
    %6 = vector.broadcast %cst_5 : f32 to vector<98x32xf32>
    %7 = arith.maximumf %5, %6 : vector<98x32xf32>
    %c0_6 = arith.constant 0 : index
    %c0_7 = arith.constant 0 : index
    %8 = vector.load %arg6[%c0_6, %c0_7] : memref<98x32xf32, #tpu.memory_space<vmem>>, vector<98x32xf32>
    tpu.vector_store %arg6[%c0_6, %c0_7], %7 {strides = array<i32>} : memref<98x32xf32, #tpu.memory_space<vmem>>, vector<98x32xf32>,
    %c0_8 = arith.constant 0 : index
    %c0_9 = arith.constant 0 : index
    %9 = vector.load %arg6[%c0_8, %c0_9] : memref<98x32xf32, #tpu.memory_space<vmem>>, vector<5x32xf32>
    %c1 = arith.constant 1 : index
    %c0_10 = arith.constant 0 : index
    %10 = vector.load %arg6[%c1, %c0_10] : memref<98x32xf32, #tpu.memory_space<vmem>>, vector<5x32xf32>
    %c2 = arith.constant 2 : index
    %c0_11 = arith.constant 0 : index
    %11 = vector.load %arg6[%c2, %c0_11] : memref<98x32xf32, #tpu.memory_space<vmem>>, vector<5x32xf32>
    %c7 = arith.constant 7 : index
    %c0_12 = arith.constant 0 : index
    %12 = vector.load %arg6[%c7, %c0_12] : memref<98x32xf32, #tpu.memory_space<vmem>>, vector<5x32xf32>
    %c8 = arith.constant 8 : index
    %c0_13 = arith.constant 0 : index
    %13 = vector.load %arg6[%c8, %c0_13] : memref<98x32xf32, #tpu.memory_space<vmem>>, vector<5x32xf32>
    %c9 = arith.constant 9 : index
    %c0_14 = arith.constant 0 : index
    %14 = vector.load %arg6[%c9, %c0_14] : memref<98x32xf32, #tpu.memory_space<vmem>>, vector<5x32xf32>
    %c14 = arith.constant 14 : index
    %c0_15 = arith.constant 0 : index
    %15 = vector.load %arg6[%c14, %c0_15] : memref<98x32xf32, #tpu.memory_space<vmem>>, vector<5x32xf32>
    %c15 = arith.constant 15 : index
    %c0_16 = arith.constant 0 : index
    %16 = vector.load %arg6[%c15, %c0_16] : memref<98x32xf32, #tpu.memory_space<vmem>>, vector<5x32xf32>
    %c16 = arith.constant 16 : index
    %c0_17 = arith.constant 0 : index
    %17 = vector.load %arg6[%c16, %c0_17] : memref<98x32xf32, #tpu.memory_space<vmem>>, vector<5x32xf32>
    %18 = tpu.concatenate %9, %10, %11, %12, %13, %14, %15, %16, %17 in 1 : vector<5x32xf32>, vector<5x32xf32>, vector<5x32xf32>, vector<5x32xf32>, vector<5x32xf32>, vector<5x32xf32>, vector<5x32xf32>, vector<5x32xf32>, vector<5x32xf32> -> vector<5x288xf32>
    %c7_18 = arith.constant 7 : index
    %c0_19 = arith.constant 0 : index
    %19 = vector.load %arg6[%c7_18, %c0_19] : memref<98x32xf32, #tpu.memory_space<vmem>>, vector<5x32xf32>
    %c8_20 = arith.constant 8 : index
    %c0_21 = arith.constant 0 : index
    %20 = vector.load %arg6[%c8_20, %c0_21] : memref<98x32xf32, #tpu.memory_space<vmem>>, vector<5x32xf32>
    %c9_22 = arith.constant 9 : index
    %c0_23 = arith.constant 0 : index
    %21 = vector.load %arg6[%c9_22, %c0_23] : memref<98x32xf32, #tpu.memory_space<vmem>>, vector<5x32xf32>
    %c14_24 = arith.constant 14 : index
    %c0_25 = arith.constant 0 : index
    %22 = vector.load %arg6[%c14_24, %c0_25] : memref<98x32xf32, #tpu.memory_space<vmem>>, vector<5x32xf32>
    %c15_26 = arith.constant 15 : index
    %c0_27 = arith.constant 0 : index
    %23 = vector.load %arg6[%c15_26, %c0_27] : memref<98x32xf32, #tpu.memory_space<vmem>>, vector<5x32xf32>
    %c16_28 = arith.constant 16 : index
    %c0_29 = arith.constant 0 : index
    %24 = vector.load %arg6[%c16_28, %c0_29] : memref<98x32xf32, #tpu.memory_space<vmem>>, vector<5x32xf32>
    %c21 = arith.constant 21 : index
    %c0_30 = arith.constant 0 : index
    %25 = vector.load %arg6[%c21, %c0_30] : memref<98x32xf32, #tpu.memory_space<vmem>>, vector<5x32xf32>
    %c22 = arith.constant 22 : index
    %c0_31 = arith.constant 0 : index
    %26 = vector.load %arg6[%c22, %c0_31] : memref<98x32xf32, #tpu.memory_space<vmem>>, vector<5x32xf32>
    %c23 = arith.constant 23 : index
    %c0_32 = arith.constant 0 : index
    %27 = vector.load %arg6[%c23, %c0_32] : memref<98x32xf32, #tpu.memory_space<vmem>>, vector<5x32xf32>
    %28 = tpu.concatenate %19, %20, %21, %22, %23, %24, %25, %26, %27 in 1 : vector<5x32xf32>, vector<5x32xf32>, vector<5x32xf32>, vector<5x32xf32>, vector<5x32xf32>, vector<5x32xf32>, vector<5x32xf32>, vector<5x32xf32>, vector<5x32xf32> -> vector<5x288xf32>
    %c14_33 = arith.constant 14 : index
    %c0_34 = arith.constant 0 : index
    %29 = vector.load %arg6[%c14_33, %c0_34] : memref<98x32xf32, #tpu.memory_space<vmem>>, vector<5x32xf32>
    %c15_35 = arith.constant 15 : index
    %c0_36 = arith.constant 0 : index
    %30 = vector.load %arg6[%c15_35, %c0_36] : memref<98x32xf32, #tpu.memory_space<vmem>>, vector<5x32xf32>
    %c16_37 = arith.constant 16 : index
    %c0_38 = arith.constant 0 : index
    %31 = vector.load %arg6[%c16_37, %c0_38] : memref<98x32xf32, #tpu.memory_space<vmem>>, vector<5x32xf32>
    %c21_39 = arith.constant 21 : index
    %c0_40 = arith.constant 0 : index
    %32 = vector.load %arg6[%c21_39, %c0_40] : memref<98x32xf32, #tpu.memory_space<vmem>>, vector<5x32xf32>
    %c22_41 = arith.constant 22 : index
    %c0_42 = arith.constant 0 : index
    %33 = vector.load %arg6[%c22_41, %c0_42] : memref<98x32xf32, #tpu.memory_space<vmem>>, vector<5x32xf32>
    %c23_43 = arith.constant 23 : index
    %c0_44 = arith.constant 0 : index
    %34 = vector.load %arg6[%c23_43, %c0_44] : memref<98x32xf32, #tpu.memory_space<vmem>>, vector<5x32xf32>
    %c28 = arith.constant 28 : index
    %c0_45 = arith.constant 0 : index
    %35 = vector.load %arg6[%c28, %c0_45] : memref<98x32xf32, #tpu.memory_space<vmem>>, vector<5x32xf32>
    %c29 = arith.constant 29 : index
    %c0_46 = arith.constant 0 : index
    %36 = vector.load %arg6[%c29, %c0_46] : memref<98x32xf32, #tpu.memory_space<vmem>>, vector<5x32xf32>
    %c30 = arith.constant 30 : index
    %c0_47 = arith.constant 0 : index
    %37 = vector.load %arg6[%c30, %c0_47] : memref<98x32xf32, #tpu.memory_space<vmem>>, vector<5x32xf32>
    %38 = tpu.concatenate %29, %30, %31, %32, %33, %34, %35, %36, %37 in 1 : vector<5x32xf32>, vector<5x32xf32>, vector<5x32xf32>, vector<5x32xf32>, vector<5x32xf32>, vector<5x32xf32>, vector<5x32xf32>, vector<5x32xf32>, vector<5x32xf32> -> vector<5x288xf32>
    %c21_48 = arith.constant 21 : index
    %c0_49 = arith.constant 0 : index
    %39 = vector.load %arg6[%c21_48, %c0_49] : memref<98x32xf32, #tpu.memory_space<vmem>>, vector<5x32xf32>
    %c22_50 = arith.constant 22 : index
    %c0_51 = arith.constant 0 : index
    %40 = vector.load %arg6[%c22_50, %c0_51] : memref<98x32xf32, #tpu.memory_space<vmem>>, vector<5x32xf32>
    %c23_52 = arith.constant 23 : index
    %c0_53 = arith.constant 0 : index
    %41 = vector.load %arg6[%c23_52, %c0_53] : memref<98x32xf32, #tpu.memory_space<vmem>>, vector<5x32xf32>
    %c28_54 = arith.constant 28 : index
    %c0_55 = arith.constant 0 : index
    %42 = vector.load %arg6[%c28_54, %c0_55] : memref<98x32xf32, #tpu.memory_space<vmem>>, vector<5x32xf32>
    %c29_56 = arith.constant 29 : index
    %c0_57 = arith.constant 0 : index
    %43 = vector.load %arg6[%c29_56, %c0_57] : memref<98x32xf32, #tpu.memory_space<vmem>>, vector<5x32xf32>
    %c30_58 = arith.constant 30 : index
    %c0_59 = arith.constant 0 : index
    %44 = vector.load %arg6[%c30_58, %c0_59] : memref<98x32xf32, #tpu.memory_space<vmem>>, vector<5x32xf32>
    %c35 = arith.constant 35 : index
    %c0_60 = arith.constant 0 : index
    %45 = vector.load %arg6[%c35, %c0_60] : memref<98x32xf32, #tpu.memory_space<vmem>>, vector<5x32xf32>
    %c36 = arith.constant 36 : index
    %c0_61 = arith.constant 0 : index
    %46 = vector.load %arg6[%c36, %c0_61] : memref<98x32xf32, #tpu.memory_space<vmem>>, vector<5x32xf32>
    %c37 = arith.constant 37 : index
    %c0_62 = arith.constant 0 : index
    %47 = vector.load %arg6[%c37, %c0_62] : memref<98x32xf32, #tpu.memory_space<vmem>>, vector<5x32xf32>
    %48 = tpu.concatenate %39, %40, %41, %42, %43, %44, %45, %46, %47 in 1 : vector<5x32xf32>, vector<5x32xf32>, vector<5x32xf32>, vector<5x32xf32>, vector<5x32xf32>, vector<5x32xf32>, vector<5x32xf32>, vector<5x32xf32>, vector<5x32xf32> -> vector<5x288xf32>
    %c28_63 = arith.constant 28 : index
    %c0_64 = arith.constant 0 : index
    %49 = vector.load %arg6[%c28_63, %c0_64] : memref<98x32xf32, #tpu.memory_space<vmem>>, vector<5x32xf32>
    %c29_65 = arith.constant 29 : index
    %c0_66 = arith.constant 0 : index
    %50 = vector.load %arg6[%c29_65, %c0_66] : memref<98x32xf32, #tpu.memory_space<vmem>>, vector<5x32xf32>
    %c30_67 = arith.constant 30 : index
    %c0_68 = arith.constant 0 : index
    %51 = vector.load %arg6[%c30_67, %c0_68] : memref<98x32xf32, #tpu.memory_space<vmem>>, vector<5x32xf32>
    %c35_69 = arith.constant 35 : index
    %c0_70 = arith.constant 0 : index
    %52 = vector.load %arg6[%c35_69, %c0_70] : memref<98x32xf32, #tpu.memory_space<vmem>>, vector<5x32xf32>
    %c36_71 = arith.constant 36 : index
    %c0_72 = arith.constant 0 : index
    %53 = vector.load %arg6[%c36_71, %c0_72] : memref<98x32xf32, #tpu.memory_space<vmem>>, vector<5x32xf32>
    %c37_73 = arith.constant 37 : index
    %c0_74 = arith.constant 0 : index
    %54 = vector.load %arg6[%c37_73, %c0_74] : memref<98x32xf32, #tpu.memory_space<vmem>>, vector<5x32xf32>
    %c42 = arith.constant 42 : index
    %c0_75 = arith.constant 0 : index
    %55 = vector.load %arg6[%c42, %c0_75] : memref<98x32xf32, #tpu.memory_space<vmem>>, vector<5x32xf32>
    %c43 = arith.constant 43 : index
    %c0_76 = arith.constant 0 : index
    %56 = vector.load %arg6[%c43, %c0_76] : memref<98x32xf32, #tpu.memory_space<vmem>>, vector<5x32xf32>
    %c44 = arith.constant 44 : index
    %c0_77 = arith.constant 0 : index
    %57 = vector.load %arg6[%c44, %c0_77] : memref<98x32xf32, #tpu.memory_space<vmem>>, vector<5x32xf32>
    %58 = tpu.concatenate %49, %50, %51, %52, %53, %54, %55, %56, %57 in 1 : vector<5x32xf32>, vector<5x32xf32>, vector<5x32xf32>, vector<5x32xf32>, vector<5x32xf32>, vector<5x32xf32>, vector<5x32xf32>, vector<5x32xf32>, vector<5x32xf32> -> vector<5x288xf32>
    %c49 = arith.constant 49 : index
    %c0_78 = arith.constant 0 : index
    %59 = vector.load %arg6[%c49, %c0_78] : memref<98x32xf32, #tpu.memory_space<vmem>>, vector<5x32xf32>
    %c50 = arith.constant 50 : index
    %c0_79 = arith.constant 0 : index
    %60 = vector.load %arg6[%c50, %c0_79] : memref<98x32xf32, #tpu.memory_space<vmem>>, vector<5x32xf32>
    %c51 = arith.constant 51 : index
    %c0_80 = arith.constant 0 : index
    %61 = vector.load %arg6[%c51, %c0_80] : memref<98x32xf32, #tpu.memory_space<vmem>>, vector<5x32xf32>
    %c56 = arith.constant 56 : index
    %c0_81 = arith.constant 0 : index
    %62 = vector.load %arg6[%c56, %c0_81] : memref<98x32xf32, #tpu.memory_space<vmem>>, vector<5x32xf32>
    %c57 = arith.constant 57 : index
    %c0_82 = arith.constant 0 : index
    %63 = vector.load %arg6[%c57, %c0_82] : memref<98x32xf32, #tpu.memory_space<vmem>>, vector<5x32xf32>
    %c58 = arith.constant 58 : index
    %c0_83 = arith.constant 0 : index
    %64 = vector.load %arg6[%c58, %c0_83] : memref<98x32xf32, #tpu.memory_space<vmem>>, vector<5x32xf32>
    %c63 = arith.constant 63 : index
    %c0_84 = arith.constant 0 : index
    %65 = vector.load %arg6[%c63, %c0_84] : memref<98x32xf32, #tpu.memory_space<vmem>>, vector<5x32xf32>
    %c64 = arith.constant 64 : index
    %c0_85 = arith.constant 0 : index
    %66 = vector.load %arg6[%c64, %c0_85] : memref<98x32xf32, #tpu.memory_space<vmem>>, vector<5x32xf32>
    %c65 = arith.constant 65 : index
    %c0_86 = arith.constant 0 : index
    %67 = vector.load %arg6[%c65, %c0_86] : memref<98x32xf32, #tpu.memory_space<vmem>>, vector<5x32xf32>
    %68 = tpu.concatenate %59, %60, %61, %62, %63, %64, %65, %66, %67 in 1 : vector<5x32xf32>, vector<5x32xf32>, vector<5x32xf32>, vector<5x32xf32>, vector<5x32xf32>, vector<5x32xf32>, vector<5x32xf32>, vector<5x32xf32>, vector<5x32xf32> -> vector<5x288xf32>
    %c56_87 = arith.constant 56 : index
    %c0_88 = arith.constant 0 : index
    %69 = vector.load %arg6[%c56_87, %c0_88] : memref<98x32xf32, #tpu.memory_space<vmem>>, vector<5x32xf32>
    %c57_89 = arith.constant 57 : index
    %c0_90 = arith.constant 0 : index
    %70 = vector.load %arg6[%c57_89, %c0_90] : memref<98x32xf32, #tpu.memory_space<vmem>>, vector<5x32xf32>
    %c58_91 = arith.constant 58 : index
    %c0_92 = arith.constant 0 : index
    %71 = vector.load %arg6[%c58_91, %c0_92] : memref<98x32xf32, #tpu.memory_space<vmem>>, vector<5x32xf32>
    %c63_93 = arith.constant 63 : index
    %c0_94 = arith.constant 0 : index
    %72 = vector.load %arg6[%c63_93, %c0_94] : memref<98x32xf32, #tpu.memory_space<vmem>>, vector<5x32xf32>
    %c64_95 = arith.constant 64 : index
    %c0_96 = arith.constant 0 : index
    %73 = vector.load %arg6[%c64_95, %c0_96] : memref<98x32xf32, #tpu.memory_space<vmem>>, vector<5x32xf32>
    %c65_97 = arith.constant 65 : index
    %c0_98 = arith.constant 0 : index
    %74 = vector.load %arg6[%c65_97, %c0_98] : memref<98x32xf32, #tpu.memory_space<vmem>>, vector<5x32xf32>
    %c70 = arith.constant 70 : index
    %c0_99 = arith.constant 0 : index
    %75 = vector.load %arg6[%c70, %c0_99] : memref<98x32xf32, #tpu.memory_space<vmem>>, vector<5x32xf32>
    %c71 = arith.constant 71 : index
    %c0_100 = arith.constant 0 : index
    %76 = vector.load %arg6[%c71, %c0_100] : memref<98x32xf32, #tpu.memory_space<vmem>>, vector<5x32xf32>
    %c72 = arith.constant 72 : index
    %c0_101 = arith.constant 0 : index
    %77 = vector.load %arg6[%c72, %c0_101] : memref<98x32xf32, #tpu.memory_space<vmem>>, vector<5x32xf32>
    %78 = tpu.concatenate %69, %70, %71, %72, %73, %74, %75, %76, %77 in 1 : vector<5x32xf32>, vector<5x32xf32>, vector<5x32xf32>, vector<5x32xf32>, vector<5x32xf32>, vector<5x32xf32>, vector<5x32xf32>, vector<5x32xf32>, vector<5x32xf32> -> vector<5x288xf32>
    %c63_102 = arith.constant 63 : index
    %c0_103 = arith.constant 0 : index
    %79 = vector.load %arg6[%c63_102, %c0_103] : memref<98x32xf32, #tpu.memory_space<vmem>>, vector<5x32xf32>
    %c64_104 = arith.constant 64 : index
    %c0_105 = arith.constant 0 : index
    %80 = vector.load %arg6[%c64_104, %c0_105] : memref<98x32xf32, #tpu.memory_space<vmem>>, vector<5x32xf32>
    %c65_106 = arith.constant 65 : index
    %c0_107 = arith.constant 0 : index
    %81 = vector.load %arg6[%c65_106, %c0_107] : memref<98x32xf32, #tpu.memory_space<vmem>>, vector<5x32xf32>
    %c70_108 = arith.constant 70 : index
    %c0_109 = arith.constant 0 : index
    %82 = vector.load %arg6[%c70_108, %c0_109] : memref<98x32xf32, #tpu.memory_space<vmem>>, vector<5x32xf32>
    %c71_110 = arith.constant 71 : index
    %c0_111 = arith.constant 0 : index
    %83 = vector.load %arg6[%c71_110, %c0_111] : memref<98x32xf32, #tpu.memory_space<vmem>>, vector<5x32xf32>
    %c72_112 = arith.constant 72 : index
    %c0_113 = arith.constant 0 : index
    %84 = vector.load %arg6[%c72_112, %c0_113] : memref<98x32xf32, #tpu.memory_space<vmem>>, vector<5x32xf32>
    %c77 = arith.constant 77 : index
    %c0_114 = arith.constant 0 : index
    %85 = vector.load %arg6[%c77, %c0_114] : memref<98x32xf32, #tpu.memory_space<vmem>>, vector<5x32xf32>
    %c78 = arith.constant 78 : index
    %c0_115 = arith.constant 0 : index
    %86 = vector.load %arg6[%c78, %c0_115] : memref<98x32xf32, #tpu.memory_space<vmem>>, vector<5x32xf32>
    %c79 = arith.constant 79 : index
    %c0_116 = arith.constant 0 : index
    %87 = vector.load %arg6[%c79, %c0_116] : memref<98x32xf32, #tpu.memory_space<vmem>>, vector<5x32xf32>
    %88 = tpu.concatenate %79, %80, %81, %82, %83, %84, %85, %86, %87 in 1 : vector<5x32xf32>, vector<5x32xf32>, vector<5x32xf32>, vector<5x32xf32>, vector<5x32xf32>, vector<5x32xf32>, vector<5x32xf32>, vector<5x32xf32>, vector<5x32xf32> -> vector<5x288xf32>
    %c70_117 = arith.constant 70 : index
    %c0_118 = arith.constant 0 : index
    %89 = vector.load %arg6[%c70_117, %c0_118] : memref<98x32xf32, #tpu.memory_space<vmem>>, vector<5x32xf32>
    %c71_119 = arith.constant 71 : index
    %c0_120 = arith.constant 0 : index
    %90 = vector.load %arg6[%c71_119, %c0_120] : memref<98x32xf32, #tpu.memory_space<vmem>>, vector<5x32xf32>
    %c72_121 = arith.constant 72 : index
    %c0_122 = arith.constant 0 : index
    %91 = vector.load %arg6[%c72_121, %c0_122] : memref<98x32xf32, #tpu.memory_space<vmem>>, vector<5x32xf32>
    %c77_123 = arith.constant 77 : index
    %c0_124 = arith.constant 0 : index
    %92 = vector.load %arg6[%c77_123, %c0_124] : memref<98x32xf32, #tpu.memory_space<vmem>>, vector<5x32xf32>
    %c78_125 = arith.constant 78 : index
    %c0_126 = arith.constant 0 : index
    %93 = vector.load %arg6[%c78_125, %c0_126] : memref<98x32xf32, #tpu.memory_space<vmem>>, vector<5x32xf32>
    %c79_127 = arith.constant 79 : index
    %c0_128 = arith.constant 0 : index
    %94 = vector.load %arg6[%c79_127, %c0_128] : memref<98x32xf32, #tpu.memory_space<vmem>>, vector<5x32xf32>
    %c84 = arith.constant 84 : index
    %c0_129 = arith.constant 0 : index
    %95 = vector.load %arg6[%c84, %c0_129] : memref<98x32xf32, #tpu.memory_space<vmem>>, vector<5x32xf32>
    %c85 = arith.constant 85 : index
    %c0_130 = arith.constant 0 : index
    %96 = vector.load %arg6[%c85, %c0_130] : memref<98x32xf32, #tpu.memory_space<vmem>>, vector<5x32xf32>
    %c86 = arith.constant 86 : index
    %c0_131 = arith.constant 0 : index
    %97 = vector.load %arg6[%c86, %c0_131] : memref<98x32xf32, #tpu.memory_space<vmem>>, vector<5x32xf32>
    %98 = tpu.concatenate %89, %90, %91, %92, %93, %94, %95, %96, %97 in 1 : vector<5x32xf32>, vector<5x32xf32>, vector<5x32xf32>, vector<5x32xf32>, vector<5x32xf32>, vector<5x32xf32>, vector<5x32xf32>, vector<5x32xf32>, vector<5x32xf32> -> vector<5x288xf32>
    %c77_132 = arith.constant 77 : index
    %c0_133 = arith.constant 0 : index
    %99 = vector.load %arg6[%c77_132, %c0_133] : memref<98x32xf32, #tpu.memory_space<vmem>>, vector<5x32xf32>
    %c78_134 = arith.constant 78 : index
    %c0_135 = arith.constant 0 : index
    %100 = vector.load %arg6[%c78_134, %c0_135] : memref<98x32xf32, #tpu.memory_space<vmem>>, vector<5x32xf32>
    %c79_136 = arith.constant 79 : index
    %c0_137 = arith.constant 0 : index
    %101 = vector.load %arg6[%c79_136, %c0_137] : memref<98x32xf32, #tpu.memory_space<vmem>>, vector<5x32xf32>
    %c84_138 = arith.constant 84 : index
    %c0_139 = arith.constant 0 : index
    %102 = vector.load %arg6[%c84_138, %c0_139] : memref<98x32xf32, #tpu.memory_space<vmem>>, vector<5x32xf32>
    %c85_140 = arith.constant 85 : index
    %c0_141 = arith.constant 0 : index
    %103 = vector.load %arg6[%c85_140, %c0_141] : memref<98x32xf32, #tpu.memory_space<vmem>>, vector<5x32xf32>
    %c86_142 = arith.constant 86 : index
    %c0_143 = arith.constant 0 : index
    %104 = vector.load %arg6[%c86_142, %c0_143] : memref<98x32xf32, #tpu.memory_space<vmem>>, vector<5x32xf32>
    %c91 = arith.constant 91 : index
    %c0_144 = arith.constant 0 : index
    %105 = vector.load %arg6[%c91, %c0_144] : memref<98x32xf32, #tpu.memory_space<vmem>>, vector<5x32xf32>
    %c92 = arith.constant 92 : index
    %c0_145 = arith.constant 0 : index
    %106 = vector.load %arg6[%c92, %c0_145] : memref<98x32xf32, #tpu.memory_space<vmem>>, vector<5x32xf32>
    %c93 = arith.constant 93 : index
    %c0_146 = arith.constant 0 : index
    %107 = vector.load %arg6[%c93, %c0_146] : memref<98x32xf32, #tpu.memory_space<vmem>>, vector<5x32xf32>
    %108 = tpu.concatenate %99, %100, %101, %102, %103, %104, %105, %106, %107 in 1 : vector<5x32xf32>, vector<5x32xf32>, vector<5x32xf32>, vector<5x32xf32>, vector<5x32xf32>, vector<5x32xf32>, vector<5x32xf32>, vector<5x32xf32>, vector<5x32xf32> -> vector<5x288xf32>
    %109 = tpu.concatenate %18, %28, %38, %48, %58, %68, %78, %88, %98, %108 in 0 : vector<5x288xf32>, vector<5x288xf32>, vector<5x288xf32>, vector<5x288xf32>, vector<5x288xf32>, vector<5x288xf32>, vector<5x288xf32>, vector<5x288xf32>, vector<5x288xf32>, vector<5x288xf32> -> vector<50x288xf32>
    %c0_147 = arith.constant 0 : index
    %c0_148 = arith.constant 0 : index
    %110 = vector.load %arg3[%c0_147, %c0_148] : memref<288x32xf32, #tpu.memory_space<vmem>>, vector<288x32xf32>
    %cst_149 = arith.constant dense<0.000000e+00> : vector<50x32xf32>
    %111 = tpu.matmul %109, %110, %cst_149 {dimension_numbers = #tpu.dot_dimension_numbers<[1], [0], [0], [1], [0, 0, 1, 1], [], []>} : vector<50x288xf32>, vector<288x32xf32>, vector<50x32xf32> -> vector<50x32xf32>
    %c0_150 = arith.constant 0 : index
    %c0_151 = arith.constant 0 : index
    %112 = vector.load %arg4[%c0_150, %c0_151] : memref<1x32xf32, #tpu.memory_space<vmem>>, vector<1x32xf32>
    %113 = vector.broadcast %112 : vector<1x32xf32> to vector<50x32xf32>
    %114 = arith.addf %111, %113 : vector<50x32xf32>
    %cst_152 = arith.constant 0.000000e+00 : f32
    %115 = vector.broadcast %cst_152 : f32 to vector<50x32xf32>
    %116 = arith.maximumf %114, %115 : vector<50x32xf32>
    %c0_153 = arith.constant 0 : index
    %c0_154 = arith.constant 0 : index
    %117 = vector.load %arg5[%c0_153, %c0_154] : memref<50x32xf32, #tpu.memory_space<vmem>>, vector<50x32xf32>
    tpu.vector_store %arg5[%c0_153, %c0_154], %116 {strides = array<i32>} : memref<50x32xf32, #tpu.memory_space<vmem>>, vector<50x32xf32>,
    return
  }
}

module attributes {stable_mosaic.version = 11 : i64} {
  func.func @_actor_head_kernel(%arg0: memref<2x800xf32, #tpu.memory_space<vmem>>, %arg1: memref<800x50xf32, #tpu.memory_space<vmem>>, %arg2: memref<1x50xf32, #tpu.memory_space<vmem>>, %arg3: memref<1x50xf32, #tpu.memory_space<vmem>>, %arg4: memref<1x50xf32, #tpu.memory_space<vmem>>, %arg5: memref<50x256xf32, #tpu.memory_space<vmem>>, %arg6: memref<1x256xf32, #tpu.memory_space<vmem>>, %arg7: memref<256x256xf32, #tpu.memory_space<vmem>>, %arg8: memref<1x256xf32, #tpu.memory_space<vmem>>, %arg9: memref<256x6xf32, #tpu.memory_space<vmem>>, %arg10: memref<1x6xf32, #tpu.memory_space<vmem>>, %arg11: memref<256x6xf32, #tpu.memory_space<vmem>>, %arg12: memref<1x6xf32, #tpu.memory_space<vmem>>, %arg13: memref<2x6xf32, #tpu.memory_space<vmem>>, %arg14: memref<1x6xf32, #tpu.memory_space<vmem>>, %arg15: memref<1x6xf32, #tpu.memory_space<vmem>>, %arg16: memref<2x128xf32, #tpu.memory_space<vmem>>) attributes {dimension_semantics = [], scalar_prefetch = 0 : i64, scratch_operands = 0 : i64, tpu.core_type = #tpu.core_type<tc>} {
    %c0 = arith.constant 0 : index
    %c0_0 = arith.constant 0 : index
    %0 = vector.load %arg0[%c0, %c0_0] : memref<2x800xf32, #tpu.memory_space<vmem>>, vector<2x800xf32>
    %c0_1 = arith.constant 0 : index
    %c0_2 = arith.constant 0 : index
    %1 = vector.load %arg1[%c0_1, %c0_2] : memref<800x50xf32, #tpu.memory_space<vmem>>, vector<800x50xf32>
    %cst = arith.constant dense<0.000000e+00> : vector<2x50xf32>
    %2 = tpu.matmul %0, %1, %cst {dimension_numbers = #tpu.dot_dimension_numbers<[1], [0], [0], [1], [0, 0, 1, 1], [], []>} : vector<2x800xf32>, vector<800x50xf32>, vector<2x50xf32> -> vector<2x50xf32>
    %c0_3 = arith.constant 0 : index
    %c0_4 = arith.constant 0 : index
    %3 = vector.load %arg2[%c0_3, %c0_4] : memref<1x50xf32, #tpu.memory_space<vmem>>, vector<1x50xf32>
    %4 = vector.broadcast %3 : vector<1x50xf32> to vector<2x50xf32>
    %5 = arith.addf %2, %4 : vector<2x50xf32>
    %cst_5 = arith.constant dense<0.000000e+00> : vector<2xf32>
    %6 = vector.multi_reduction <add>, %5, %cst_5 [1] : vector<2x50xf32> to vector<2xf32>
    %7 = vector.shape_cast %6 : vector<2xf32> to vector<2x1xf32>
    %cst_6 = arith.constant 5.000000e+01 : f32
    %8 = vector.broadcast %cst_6 : f32 to vector<2x1xf32>
    %9 = arith.divf %7, %8 : vector<2x1xf32>
    %10 = vector.broadcast %9 : vector<2x1xf32> to vector<2x50xf32>
    %11 = arith.subf %5, %10 : vector<2x50xf32>
    %12 = arith.mulf %11, %11 : vector<2x50xf32>
    %cst_7 = arith.constant dense<0.000000e+00> : vector<2xf32>
    %13 = vector.multi_reduction <add>, %12, %cst_7 [1] : vector<2x50xf32> to vector<2xf32>
    %14 = vector.shape_cast %13 : vector<2xf32> to vector<2x1xf32>
    %cst_8 = arith.constant 5.000000e+01 : f32
    %15 = vector.broadcast %cst_8 : f32 to vector<2x1xf32>
    %16 = arith.divf %14, %15 : vector<2x1xf32>
    %17 = vector.broadcast %9 : vector<2x1xf32> to vector<2x50xf32>
    %18 = arith.subf %5, %17 : vector<2x50xf32>
    %cst_9 = arith.constant 9.99999974E-6 : f32
    %19 = vector.broadcast %cst_9 : f32 to vector<2x1xf32>
    %20 = arith.addf %16, %19 : vector<2x1xf32>
    %21 = math.rsqrt %20 : vector<2x1xf32>
    %22 = vector.broadcast %21 : vector<2x1xf32> to vector<2x50xf32>
    %23 = arith.mulf %18, %22 : vector<2x50xf32>
    %c0_10 = arith.constant 0 : index
    %c0_11 = arith.constant 0 : index
    %24 = vector.load %arg3[%c0_10, %c0_11] : memref<1x50xf32, #tpu.memory_space<vmem>>, vector<1x50xf32>
    %25 = vector.broadcast %24 : vector<1x50xf32> to vector<2x50xf32>
    %26 = arith.mulf %23, %25 : vector<2x50xf32>
    %c0_12 = arith.constant 0 : index
    %c0_13 = arith.constant 0 : index
    %27 = vector.load %arg4[%c0_12, %c0_13] : memref<1x50xf32, #tpu.memory_space<vmem>>, vector<1x50xf32>
    %28 = vector.broadcast %27 : vector<1x50xf32> to vector<2x50xf32>
    %29 = arith.addf %26, %28 : vector<2x50xf32>
    %30 = math.tanh %29 : vector<2x50xf32>
    %c0_14 = arith.constant 0 : index
    %c0_15 = arith.constant 0 : index
    %31 = vector.load %arg5[%c0_14, %c0_15] : memref<50x256xf32, #tpu.memory_space<vmem>>, vector<50x256xf32>
    %cst_16 = arith.constant dense<0.000000e+00> : vector<2x256xf32>
    %32 = tpu.matmul %30, %31, %cst_16 {dimension_numbers = #tpu.dot_dimension_numbers<[1], [0], [0], [1], [0, 0, 1, 1], [], []>} : vector<2x50xf32>, vector<50x256xf32>, vector<2x256xf32> -> vector<2x256xf32>
    %c0_17 = arith.constant 0 : index
    %c0_18 = arith.constant 0 : index
    %33 = vector.load %arg6[%c0_17, %c0_18] : memref<1x256xf32, #tpu.memory_space<vmem>>, vector<1x256xf32>
    %34 = vector.broadcast %33 : vector<1x256xf32> to vector<2x256xf32>
    %35 = arith.addf %32, %34 : vector<2x256xf32>
    %cst_19 = arith.constant 0.000000e+00 : f32
    %36 = vector.broadcast %cst_19 : f32 to vector<2x256xf32>
    %37 = arith.maximumf %35, %36 : vector<2x256xf32>
    %c0_20 = arith.constant 0 : index
    %c0_21 = arith.constant 0 : index
    %38 = vector.load %arg7[%c0_20, %c0_21] : memref<256x256xf32, #tpu.memory_space<vmem>>, vector<256x256xf32>
    %cst_22 = arith.constant dense<0.000000e+00> : vector<2x256xf32>
    %39 = tpu.matmul %37, %38, %cst_22 {dimension_numbers = #tpu.dot_dimension_numbers<[1], [0], [0], [1], [0, 0, 1, 1], [], []>} : vector<2x256xf32>, vector<256x256xf32>, vector<2x256xf32> -> vector<2x256xf32>
    %c0_23 = arith.constant 0 : index
    %c0_24 = arith.constant 0 : index
    %40 = vector.load %arg8[%c0_23, %c0_24] : memref<1x256xf32, #tpu.memory_space<vmem>>, vector<1x256xf32>
    %41 = vector.broadcast %40 : vector<1x256xf32> to vector<2x256xf32>
    %42 = arith.addf %39, %41 : vector<2x256xf32>
    %cst_25 = arith.constant 0.000000e+00 : f32
    %43 = vector.broadcast %cst_25 : f32 to vector<2x256xf32>
    %44 = arith.maximumf %42, %43 : vector<2x256xf32>
    %c0_26 = arith.constant 0 : index
    %c0_27 = arith.constant 0 : index
    %45 = vector.load %arg9[%c0_26, %c0_27] : memref<256x6xf32, #tpu.memory_space<vmem>>, vector<256x6xf32>
    %cst_28 = arith.constant dense<0.000000e+00> : vector<2x6xf32>
    %46 = tpu.matmul %44, %45, %cst_28 {dimension_numbers = #tpu.dot_dimension_numbers<[1], [0], [0], [1], [0, 0, 1, 1], [], []>} : vector<2x256xf32>, vector<256x6xf32>, vector<2x6xf32> -> vector<2x6xf32>
    %c0_29 = arith.constant 0 : index
    %c0_30 = arith.constant 0 : index
    %47 = vector.load %arg10[%c0_29, %c0_30] : memref<1x6xf32, #tpu.memory_space<vmem>>, vector<1x6xf32>
    %48 = vector.broadcast %47 : vector<1x6xf32> to vector<2x6xf32>
    %49 = arith.addf %46, %48 : vector<2x6xf32>
    %c0_31 = arith.constant 0 : index
    %c0_32 = arith.constant 0 : index
    %50 = vector.load %arg11[%c0_31, %c0_32] : memref<256x6xf32, #tpu.memory_space<vmem>>, vector<256x6xf32>
    %cst_33 = arith.constant dense<0.000000e+00> : vector<2x6xf32>
    %51 = tpu.matmul %44, %50, %cst_33 {dimension_numbers = #tpu.dot_dimension_numbers<[1], [0], [0], [1], [0, 0, 1, 1], [], []>} : vector<2x256xf32>, vector<256x6xf32>, vector<2x6xf32> -> vector<2x6xf32>
    %c0_34 = arith.constant 0 : index
    %c0_35 = arith.constant 0 : index
    %52 = vector.load %arg12[%c0_34, %c0_35] : memref<1x6xf32, #tpu.memory_space<vmem>>, vector<1x6xf32>
    %53 = vector.broadcast %52 : vector<1x6xf32> to vector<2x6xf32>
    %54 = arith.addf %51, %53 : vector<2x6xf32>
    %55 = math.tanh %54 : vector<2x6xf32>
    %cst_36 = arith.constant 1.000000e+00 : f32
    %56 = vector.broadcast %cst_36 : f32 to vector<2x6xf32>
    %57 = arith.addf %55, %56 : vector<2x6xf32>
    %cst_37 = arith.constant 6.000000e+00 : f32
    %58 = vector.broadcast %cst_37 : f32 to vector<2x6xf32>
    %59 = arith.mulf %58, %57 : vector<2x6xf32>
    %cst_38 = arith.constant -1.000000e+01 : f32
    %60 = vector.broadcast %cst_38 : f32 to vector<2x6xf32>
    %61 = arith.addf %60, %59 : vector<2x6xf32>
    %62 = math.exp %61 : vector<2x6xf32>
    %c0_39 = arith.constant 0 : index
    %c0_40 = arith.constant 0 : index
    %63 = vector.load %arg13[%c0_39, %c0_40] : memref<2x6xf32, #tpu.memory_space<vmem>>, vector<2x6xf32>
    %64 = arith.mulf %62, %63 : vector<2x6xf32>
    %65 = arith.addf %49, %64 : vector<2x6xf32>
    %66 = math.tanh %65 : vector<2x6xf32>
    %c0_41 = arith.constant 0 : index
    %c0_42 = arith.constant 0 : index
    %67 = vector.load %arg14[%c0_41, %c0_42] : memref<1x6xf32, #tpu.memory_space<vmem>>, vector<1x6xf32>
    %68 = vector.broadcast %67 : vector<1x6xf32> to vector<2x6xf32>
    %69 = arith.mulf %66, %68 : vector<2x6xf32>
    %c0_43 = arith.constant 0 : index
    %c0_44 = arith.constant 0 : index
    %70 = vector.load %arg15[%c0_43, %c0_44] : memref<1x6xf32, #tpu.memory_space<vmem>>, vector<1x6xf32>
    %71 = vector.broadcast %70 : vector<1x6xf32> to vector<2x6xf32>
    %72 = arith.addf %69, %71 : vector<2x6xf32>
    %cst_45 = arith.constant -5.000000e-01 : f32
    %73 = vector.broadcast %cst_45 : f32 to vector<2x6xf32>
    %74 = arith.mulf %73, %63 : vector<2x6xf32>
    %75 = arith.mulf %74, %63 : vector<2x6xf32>
    %76 = arith.subf %75, %61 : vector<2x6xf32>
    %cst_46 = arith.constant 0.918938517 : f32
    %77 = vector.broadcast %cst_46 : f32 to vector<2x6xf32>
    %78 = arith.subf %76, %77 : vector<2x6xf32>
    %79 = arith.mulf %66, %66 : vector<2x6xf32>
    %cst_47 = arith.constant 1.000000e+00 : f32
    %80 = vector.broadcast %cst_47 : f32 to vector<2x6xf32>
    %81 = arith.subf %80, %79 : vector<2x6xf32>
    %82 = vector.broadcast %67 : vector<1x6xf32> to vector<2x6xf32>
    %83 = arith.mulf %82, %81 : vector<2x6xf32>
    %cst_48 = arith.constant 9.99999997E-7 : f32
    %84 = vector.broadcast %cst_48 : f32 to vector<2x6xf32>
    %85 = arith.addf %83, %84 : vector<2x6xf32>
    %86 = math.log %85 : vector<2x6xf32>
    %87 = arith.subf %78, %86 : vector<2x6xf32>
    %cst_49 = arith.constant dense<0.000000e+00> : vector<2xf32>
    %88 = vector.multi_reduction <add>, %87, %cst_49 [1] : vector<2x6xf32> to vector<2xf32>
    %89 = vector.shape_cast %88 : vector<2xf32> to vector<2x1xf32>
    %cst_50 = arith.constant 0.000000e+00 : f32
    %90 = vector.broadcast %cst_50 : f32 to vector<2x121xf32>
    %91 = tpu.concatenate %72, %89, %90 in 1 : vector<2x6xf32>, vector<2x1xf32>, vector<2x121xf32> -> vector<2x128xf32>
    %c0_51 = arith.constant 0 : index
    %c0_52 = arith.constant 0 : index
    %92 = vector.load %arg16[%c0_51, %c0_52] : memref<2x128xf32, #tpu.memory_space<vmem>>, vector<2x128xf32>
    tpu.vector_store %arg16[%c0_51, %c0_52], %91 {strides = array<i32>} : memref<2x128xf32, #tpu.memory_space<vmem>>, vector<2x128xf32>,
    return
  }
}

</mosaic_0001>

<llo_original>
// kernel: sac_ae_actor_forward.2
$region0: #{sac_ae_actor_forward.2}
  #allocation0 [shape = 'u32[]', space=smem, size = 0x4, offset = 0x4, fixed_abs, tag = 'smem constant byte address 0x4 - core index']
  #allocation1 [shape = 'u32[144,128]{1,0:T(1,128)}', space=vmem, size = 0x12000, scoped, tag = 'internal scratch']
  #allocation2 [shape = 'f32[98,32]{1,0:T(8,128)}', space=vmem, size = 0xd000, scoped, tag = 'scratch operand']
  %s0 = inlined_call_operand.vmem [shape: f32[98,36], index: 0, kind: input, shape index: {}]
  %s1 = inlined_call_operand.vmem [shape: f32[36,32], index: 1, kind: input, shape index: {}]
  %s2 = inlined_call_operand.vmem [shape: f32[1,32], index: 2, kind: input, shape index: {}]
  %s3 = inlined_call_operand.vmem [shape: f32[288,32], index: 3, kind: input, shape index: {}]
  %s4 = inlined_call_operand.vmem [shape: f32[1,32], index: 4, kind: input, shape index: {}]
  %s5 = inlined_call_operand.vmem [shape: f32[50,32], index: 5, kind: output, shape index: {}]
  %s6 = sld [smem:[#allocation0]]
  $region30: #{sac_ae_actor_forward.2} parent=0
    _
  %s8 = ssub.s32 1, %s6
  %s9 = scalar_select 0, %s8, %s6
  // Predicated region
  $region2: #{sac_ae_actor_forward.2} parent=0 // pred_check
    _
  $region3: #{sac_ae_actor_forward.2} parent=0 // pred_check_branch
    %11 = sbr.rel (0) target = $region5
  $region4: #{sac_ae_actor_forward.2} parent=0 // pred_region
    _
  $region5: #{sac_ae_actor_forward.2} parent=0 // pred_fallthru
    _
  // Predicated region
  $region6: #{sac_ae_actor_forward.2} parent=0 // pred_check
    _
  $region7: #{sac_ae_actor_forward.2} parent=0 // pred_check_branch
    %13 = sbr.rel (0) target = $region9
  $region8: #{sac_ae_actor_forward.2} parent=0 // pred_region
    _
  $region9: #{sac_ae_actor_forward.2} parent=0 // pred_fallthru
    _
  // Predicated region
  $region10: #{sac_ae_actor_forward.2} parent=0 // pred_check
    _
  $region11: #{sac_ae_actor_forward.2} parent=0 // pred_check_branch
    %15 = sbr.rel (0) target = $region13
  $region12: #{sac_ae_actor_forward.2} parent=0 // pred_region
    _
  $region13: #{sac_ae_actor_forward.2} parent=0 // pred_fallthru
    _
  // Predicated region
  $region14: #{sac_ae_actor_forward.2} parent=0 // pred_check
    _
  $region15: #{sac_ae_actor_forward.2} parent=0 // pred_check_branch
    %17 = sbr.rel (0) target = $region17
  $region16: #{sac_ae_actor_forward.2} parent=0 // pred_region
    _
  $region17: #{sac_ae_actor_forward.2} parent=0 // pred_fallthru
    _
  // Predicated region
  $region18: #{sac_ae_actor_forward.2} parent=0 // pred_check
    _
  $region19: #{sac_ae_actor_forward.2} parent=0 // pred_check_branch
    %19 = sbr.rel (0) target = $region21
  $region20: #{sac_ae_actor_forward.2} parent=0 // pred_region
    _
  $region21: #{sac_ae_actor_forward.2} parent=0 // pred_fallthru
    _
  %v20 = vld [vmem:[%s0] sm:$0xff]
  %v21 = vld [vmem:[%s0 + $0x8] sm:$0xff]
  %v22 = vld [vmem:[%s0 + $0x10] sm:$0xff]
  %v23 = vld [vmem:[%s0 + $0x18] sm:$0xff]
  %v24 = vld [vmem:[%s0 + $0x20] sm:$0xff]
  %v25 = vld [vmem:[%s0 + $0x28] sm:$0xff]
  %v26 = vld [vmem:[%s0 + $0x30] sm:$0xff]
  %v27 = vld [vmem:[%s0 + $0x38] sm:$0xff]
  %v28 = vld [vmem:[%s0 + $0x40] sm:$0xff]
  %v29 = vld [vmem:[%s0 + $0x48] sm:$0xff]
  %v30 = vld [vmem:[%s0 + $0x50] sm:$0xff]
  %v31 = vld [vmem:[%s0 + $0x58] sm:$0xff]
  %v32 = vld [vmem:[%s0 + $0x60] sm:$0x3]
  %v33 = vld [vmem:[%s1] sm:$0xff]
  %v34 = vld [vmem:[%s1 + $0x8] sm:$0xff]
  %v35 = vld [vmem:[%s1 + $0x10] sm:$0xff]
  %v36 = vld [vmem:[%s1 + $0x18] sm:$0xff]
  %v37 = vld [vmem:[%s1 + $0x20] sm:$0xf]
  %v38 = vld [vmem:[%s2] sm:$0x1]
  %v40 = vlaneseq
  %v41 = vshrl.u32 %v40, 7
  %v42 = vsub.s32 0, %v41
  %v43 = vrot.slane %v38, %v42
  %vm45 = vcmask 293888
  %v47 = vsel %vm45, %v20, 0
  %v50 = vsel %vm45, %v21, 0
  %v53 = vsel %vm45, %v22, 0
  %v56 = vsel %vm45, %v23, 0
  %v59 = vsel %vm45, %v24, 0
  %v62 = vsel %vm45, %v25, 0
  %v65 = vsel %vm45, %v26, 0
  %v68 = vsel %vm45, %v27, 0
  %v71 = vsel %vm45, %v28, 0
  %v74 = vsel %vm45, %v29, 0
  %v77 = vsel %vm45, %v30, 0
  %v80 = vsel %vm45, %v31, 0
  %v83 = vsel %vm45, %v32, 0
  %vm85 = vcmask 1043456
  %v87 = vsel %vm85, %v37, 0
  %89 = vmatprep.subr.mxu0 0.0
  %90 = vmatpush1.msra.mxu0 0.0
  %91 = vmatprep.subr.mxu0 0.0
  %92 = vmatpush1.msra.mxu0 0.0
  %93 = vmatprep.subr.mxu0 0.0
  %94 = vmatpush1.msra.mxu0 0.0
  %95 = vmatprep.subr.mxu0 0.0
  %96 = vmatpush1.msra.mxu0 0.0
  %97 = vmatprep.subr.mxu0 0.0
  %98 = vmatpush1.msra.mxu0 0.0
  %99 = vmatprep.subr.mxu0 0.0
  %100 = vmatpush1.msra.mxu0 0.0
  %101 = vmatprep.subr.mxu0 0.0
  %102 = vmatpush1.msra.mxu0 0.0
  %103 = vmatprep.subr.mxu0 0.0
  %104 = vmatpush1.msra.mxu0 0.0
  %105 = vmatprep.subr.mxu0 0.0
  %106 = vmatpush1.msra.mxu0 0.0
  %107 = vmatprep.subr.mxu0 0.0
  %108 = vmatpush1.msra.mxu0 0.0
  %109 = vmatprep.subr.mxu0 0.0
  %110 = vmatpush1.msra.mxu0 0.0
  %111 = vmatprep.subr.mxu0 0.0
  %112 = vmatpush1.msra.mxu0 %v87
  %113 = vmatprep.subr.mxu0 0.0
  %114 = vmatpush1.msra.mxu0 %v36
  %115 = vmatprep.subr.mxu0 0.0
  %116 = vmatpush1.msra.mxu0 %v35
  %117 = vmatprep.subr.mxu0 0.0
  %118 = vmatpush1.msra.mxu0 %v34
  %119 = vmatprep.subr.mxu0 0.0
  %120 = vmatpush1.msra.mxu0 %v33
  %121 = vmatprep.subr.mxu0 0.0
  %122 = vmatpush2.msra.mxu0 0.0
  %123 = vmatprep.subr.mxu0 0.0
  %124 = vmatpush2.msra.mxu0 0.0
  %125 = vmatprep.subr.mxu0 0.0
  %126 = vmatpush2.msra.mxu0 0.0
  %127 = vmatprep.subr.mxu0 0.0
  %128 = vmatpush2.msra.mxu0 0.0
  %129 = vmatprep.subr.mxu0 0.0
  %130 = vmatpush2.msra.mxu0 0.0
  %131 = vmatprep.subr.mxu0 0.0
  %132 = vmatpush2.msra.mxu0 0.0
  %133 = vmatprep.subr.mxu0 0.0
  %134 = vmatpush2.msra.mxu0 0.0
  %135 = vmatprep.subr.mxu0 0.0
  %136 = vmatpush2.msra.mxu0 0.0
  %137 = vmatprep.subr.mxu0 0.0
  %138 = vmatpush2.msra.mxu0 0.0
  %139 = vmatprep.subr.mxu0 0.0
  %140 = vmatpush2.msra.mxu0 0.0
  %141 = vmatprep.subr.mxu0 0.0
  %142 = vmatpush2.msra.mxu0 0.0
  %143 = vmatprep.subr.mxu0 0.0
  %144 = vmatpush2.msra.mxu0 0.0
  %145 = vmatprep.subr.mxu0 0.0
  %146 = vmatpush2.msra.mxu0 0.0
  %147 = vmatprep.subr.mxu0 0.0
  %148 = vmatpush2.msra.mxu0 0.0
  %149 = vmatprep.subr.mxu0 0.0
  %150 = vmatpush2.msra.mxu0 0.0
  %151 = vmatprep.subr.mxu0 0.0
  %152 = vmatpush2.msra.mxu0 0.0
  %153 = vmatprep.mubr.f32.mxu0 0.0
  %154 = vmatmul.mubr.f32.gmra.mxu0 %v47
  %v155 = vpop.f32.mrf.mxu0
  %v156 = vadd.f32 %v43, %v155
  %v157 = vpop.f32.mrf.mxu0
  %158 = vmatprep.mubr.f32.mxu0 0.0
  %159 = vmatmul.mubr.f32.gmra.mxu0 %v50
  %v160 = vpop.f32.mrf.mxu0
  %v161 = vadd.f32 %v43, %v160
  %v162 = vpop.f32.mrf.mxu0
  %163 = vmatprep.mubr.f32.mxu0 0.0
  %164 = vmatmul.mubr.f32.gmra.mxu0 %v53
  %v165 = vpop.f32.mrf.mxu0
  %v166 = vadd.f32 %v43, %v165
  %v167 = vpop.f32.mrf.mxu0
  %168 = vmatprep.mubr.f32.mxu0 0.0
  %169 = vmatmul.mubr.f32.gmra.mxu0 %v56
  %v170 = vpop.f32.mrf.mxu0
  %v171 = vadd.f32 %v43, %v170
  %v172 = vpop.f32.mrf.mxu0
  %173 = vmatprep.mubr.f32.mxu0 0.0
  %174 = vmatmul.mubr.f32.gmra.mxu0 %v59
  %v175 = vpop.f32.mrf.mxu0
  %v176 = vadd.f32 %v43, %v175
  %v177 = vpop.f32.mrf.mxu0
  %178 = vmatprep.mubr.f32.mxu0 0.0
  %179 = vmatmul.mubr.f32.gmra.mxu0 %v62
  %v180 = vpop.f32.mrf.mxu0
  %v181 = vadd.f32 %v43, %v180
  %v182 = vpop.f32.mrf.mxu0
  %183 = vmatprep.mubr.f32.mxu0 0.0
  %184 = vmatmul.mubr.f32.gmra.mxu0 %v65
  %v185 = vpop.f32.mrf.mxu0
  %v186 = vadd.f32 %v43, %v185
  %v187 = vpop.f32.mrf.mxu0
  %188 = vmatprep.mubr.f32.mxu0 0.0
  %189 = vmatmul.mubr.f32.gmra.mxu0 %v68
  %v190 = vpop.f32.mrf.mxu0
  %v191 = vadd.f32 %v43, %v190
  %v192 = vpop.f32.mrf.mxu0
  %193 = vmatprep.mubr.f32.mxu0 0.0
  %194 = vmatmul.mubr.f32.gmra.mxu0 %v71
  %v195 = vpop.f32.mrf.mxu0
  %v196 = vadd.f32 %v43, %v195
  %v197 = vpop.f32.mrf.mxu0
  %198 = vmatprep.mubr.f32.mxu0 0.0
  %199 = vmatmul.mubr.f32.gmra.mxu0 %v74
  %v200 = vpop.f32.mrf.mxu0
  %v201 = vadd.f32 %v43, %v200
  %v202 = vpop.f32.mrf.mxu0
  %203 = vmatprep.mubr.f32.mxu0 0.0
  %204 = vmatmul.mubr.f32.gmra.mxu0 %v77
  %v205 = vpop.f32.mrf.mxu0
  %v206 = vadd.f32 %v43, %v205
  %v207 = vpop.f32.mrf.mxu0
  %208 = vmatprep.mubr.f32.mxu0 0.0
  %209 = vmatmul.mubr.f32.gmra.mxu0 %v80
  %v210 = vpop.f32.mrf.mxu0
  %v211 = vadd.f32 %v43, %v210
  %v212 = vpop.f32.mrf.mxu0
  %213 = vmatprep.mubr.f32.mxu0 0.0
  %214 = vmatmul.mubr.f32.gmra.mxu0 %v83
  %v215 = vpop.f32.mrf.mxu0
  %v216 = vadd.f32 %v43, %v215
  %v217 = vpop.f32.mrf.mxu0
  %218 = vdwg.mxu0
  %v219 = vmax.f32 %v156, 0.0
  %v220 = vmax.f32 %v161, 0.0
  %v221 = vmax.f32 %v166, 0.0
  %v222 = vmax.f32 %v171, 0.0
  %v223 = vmax.f32 %v176, 0.0
  %v224 = vmax.f32 %v181, 0.0
  %v225 = vmax.f32 %v186, 0.0
  %v226 = vmax.f32 %v191, 0.0
  %v227 = vmax.f32 %v196, 0.0
  %v228 = vmax.f32 %v201, 0.0
  %v229 = vmax.f32 %v206, 0.0
  %v230 = vmax.f32 %v211, 0.0
  %v231 = vmax.f32 %v216, 0.0
  %vm232 = vcmask 261120
  %233 = vst.msk [vmem:[#allocation2] sm:$0xff] %vm232, %v219
  %234 = vst.msk [vmem:[#allocation2 + $0x8] sm:$0xff] %vm232, %v220
  %235 = vst.msk [vmem:[#allocation2 + $0x10] sm:$0xff] %vm232, %v221
  %236 = vst.msk [vmem:[#allocation2 + $0x18] sm:$0xff] %vm232, %v222
  %237 = vst.msk [vmem:[#allocation2 + $0x20] sm:$0xff] %vm232, %v223
  %238 = vst.msk [vmem:[#allocation2 + $0x28] sm:$0xff] %vm232, %v224
  %239 = vst.msk [vmem:[#allocation2 + $0x30] sm:$0xff] %vm232, %v225
  %240 = vst.msk [vmem:[#allocation2 + $0x38] sm:$0xff] %vm232, %v226
  %241 = vst.msk [vmem:[#allocation2 + $0x40] sm:$0xff] %vm232, %v227
  %242 = vst.msk [vmem:[#allocation2 + $0x48] sm:$0xff] %vm232, %v228
  %243 = vst.msk [vmem:[#allocation2 + $0x50] sm:$0xff] %vm232, %v229
  %244 = vst.msk [vmem:[#allocation2 + $0x58] sm:$0xff] %vm232, %v230
  %vm245 = vcmask 254976
  %246 = vst.msk [vmem:[#allocation2 + $0x60] sm:$0x3] %vm245, %v231
  %v247 = vld [vmem:[#allocation2] sm:$0x1f]
  %v248 = vld [vmem:[#allocation2 + $0x1] sm:$0x1f]
  %v249 = vld [vmem:[#allocation2 + $0x2] sm:$0x1f]
  %v250 = vld [vmem:[#allocation2 + $0x7] sm:$0x1f]
  %v251 = vld [vmem:[#allocation2 + $0x8] sm:$0x1f]
  %v252 = vld [vmem:[#allocation2 + $0x9] sm:$0x1f]
  %v253 = vld [vmem:[#allocation2 + $0xe] sm:$0x1f]
  %v254 = vld [vmem:[#allocation2 + $0xf] sm:$0x1f]
  %v255 = vld [vmem:[#allocation2 + $0x10] sm:$0x1f]
  %257 = vrot.lane.b32.xlu0 %v248, 32
  %v258 = vpop.permute.xlu0 %257
  %261 = vrot.lane.b32.xlu0 %v249, 64
  %v262 = vpop.permute.xlu0 %261
  %265 = vrot.lane.b32.xlu0 %v250, 96
  %v266 = vpop.permute.xlu0 %265
  %269 = vrot.lane.b32.xlu0 %v252, 32
  %v270 = vpop.permute.xlu0 %269
  %273 = vrot.lane.b32.xlu0 %v253, 64
  %v274 = vpop.permute.xlu0 %273
  %277 = vrot.lane.b32.xlu0 %v254, 96
  %v278 = vpop.permute.xlu0 %277
  %v280 = vsel %vm232, %v247, %v258
  %vm281 = vcmask 523264
  %v282 = vsel %vm281, %v280, %v262
  %vm283 = vcmask 785408
  %v284 = vsel %vm283, %v282, %v266
  %v285 = vsel %vm232, %v251, %v270
  %v286 = vsel %vm281, %v285, %v274
  %v287 = vsel %vm283, %v286, %v278
  %v288 = vld [vmem:[#allocation2 + $0x15] sm:$0x1f]
  %v289 = vld [vmem:[#allocation2 + $0x16] sm:$0x1f]
  %v290 = vld [vmem:[#allocation2 + $0x17] sm:$0x1f]
  %292 = vrot.lane.b32.xlu0 %v251, 32
  %v293 = vpop.permute.xlu0 %292
  %295 = vrot.lane.b32.xlu0 %v252, 64
  %v296 = vpop.permute.xlu0 %295
  %298 = vrot.lane.b32.xlu0 %v253, 96
  %v299 = vpop.permute.xlu0 %298
  %302 = vrot.lane.b32.xlu0 %v255, 32
  %v303 = vpop.permute.xlu0 %302
  %306 = vrot.lane.b32.xlu0 %v288, 64
  %v307 = vpop.permute.xlu0 %306
  %310 = vrot.lane.b32.xlu0 %v289, 96
  %v311 = vpop.permute.xlu0 %310
  %v313 = vsel %vm232, %v250, %v293
  %v314 = vsel %vm281, %v313, %v296
  %v315 = vsel %vm283, %v314, %v299
  %v316 = vsel %vm232, %v254, %v303
  %v317 = vsel %vm281, %v316, %v307
  %v318 = vsel %vm283, %v317, %v311
  %v319 = vld [vmem:[#allocation2 + $0x1c] sm:$0x1f]
  %v320 = vld [vmem:[#allocation2 + $0x1d] sm:$0x1f]
  %v321 = vld [vmem:[#allocation2 + $0x1e] sm:$0x1f]
  %322 = vrot.lane.b32.xlu0 %v254, 32
  %v323 = vpop.permute.xlu0 %322
  %325 = vrot.lane.b32.xlu0 %v255, 64
  %v326 = vpop.permute.xlu0 %325
  %328 = vrot.lane.b32.xlu0 %v288, 96
  %v329 = vpop.permute.xlu0 %328
  %332 = vrot.lane.b32.xlu0 %v290, 32
  %v333 = vpop.permute.xlu0 %332
  %336 = vrot.lane.b32.xlu0 %v319, 64
  %v337 = vpop.permute.xlu0 %336
  %340 = vrot.lane.b32.xlu0 %v320, 96
  %v341 = vpop.permute.xlu0 %340
  %v343 = vsel %vm232, %v253, %v323
  %v344 = vsel %vm281, %v343, %v326
  %v345 = vsel %vm283, %v344, %v329
  %v346 = vsel %vm232, %v289, %v333
  %v347 = vsel %vm281, %v346, %v337
  %v348 = vsel %vm283, %v347, %v341
  %v349 = vld [vmem:[#allocation2 + $0x23] sm:$0x1f]
  %v350 = vld [vmem:[#allocation2 + $0x24] sm:$0x1f]
  %v351 = vld [vmem:[#allocation2 + $0x25] sm:$0x1f]
  %352 = vrot.lane.b32.xlu0 %v289, 32
  %v353 = vpop.permute.xlu0 %352
  %355 = vrot.lane.b32.xlu0 %v290, 64
  %v356 = vpop.permute.xlu0 %355
  %358 = vrot.lane.b32.xlu0 %v319, 96
  %v359 = vpop.permute.xlu0 %358
  %362 = vrot.lane.b32.xlu0 %v321, 32
  %v363 = vpop.permute.xlu0 %362
  %366 = vrot.lane.b32.xlu0 %v349, 64
  %v367 = vpop.permute.xlu0 %366
  %370 = vrot.lane.b32.xlu0 %v350, 96
  %v371 = vpop.permute.xlu0 %370
  %v373 = vsel %vm232, %v288, %v353
  %v374 = vsel %vm281, %v373, %v356
  %v375 = vsel %vm283, %v374, %v359
  %v376 = vsel %vm232, %v320, %v363
  %v377 = vsel %vm281, %v376, %v367
  %v378 = vsel %vm283, %v377, %v371
  %v379 = vld [vmem:[#allocation2 + $0x2a] sm:$0x1f]
  %v380 = vld [vmem:[#allocation2 + $0x2b] sm:$0x1f]
  %v381 = vld [vmem:[#allocation2 + $0x2c] sm:$0x1f]
  %382 = vrot.lane.b32.xlu0 %v320, 32
  %v383 = vpop.permute.xlu0 %382
  %385 = vrot.lane.b32.xlu0 %v321, 64
  %v386 = vpop.permute.xlu0 %385
  %388 = vrot.lane.b32.xlu0 %v349, 96
  %v389 = vpop.permute.xlu0 %388
  %392 = vrot.lane.b32.xlu0 %v351, 32
  %v393 = vpop.permute.xlu0 %392
  %396 = vrot.lane.b32.xlu0 %v379, 64
  %v397 = vpop.permute.xlu0 %396
  %400 = vrot.lane.b32.xlu0 %v380, 96
  %v401 = vpop.permute.xlu0 %400
  %v403 = vsel %vm232, %v319, %v383
  %v404 = vsel %vm281, %v403, %v386
  %v405 = vsel %vm283, %v404, %v389
  %v406 = vsel %vm232, %v350, %v393
  %v407 = vsel %vm281, %v406, %v397
  %v408 = vsel %vm283, %v407, %v401
  %v409 = vld [vmem:[#allocation2 + $0x31] sm:$0x1f]
  %v410 = vld [vmem:[#allocation2 + $0x32] sm:$0x1f]
  %v411 = vld [vmem:[#allocation2 + $0x33] sm:$0x1f]
  %v412 = vld [vmem:[#allocation2 + $0x38] sm:$0x1f]
  %v413 = vld [vmem:[#allocation2 + $0x39] sm:$0x1f]
  %v414 = vld [vmem:[#allocation2 + $0x3a] sm:$0x1f]
  %v415 = vld [vmem:[#allocation2 + $0x3f] sm:$0x1f]
  %v416 = vld [vmem:[#allocation2 + $0x40] sm:$0x1f]
  %v417 = vld [vmem:[#allocation2 + $0x41] sm:$0x1f]
  %419 = vrot.lane.b32.xlu0 %v410, 32
  %v420 = vpop.permute.xlu0 %419
  %423 = vrot.lane.b32.xlu0 %v411, 64
  %v424 = vpop.permute.xlu0 %423
  %427 = vrot.lane.b32.xlu0 %v412, 96
  %v428 = vpop.permute.xlu0 %427
  %431 = vrot.lane.b32.xlu0 %v414, 32
  %v432 = vpop.permute.xlu0 %431
  %435 = vrot.lane.b32.xlu0 %v415, 64
  %v436 = vpop.permute.xlu0 %435
  %439 = vrot.lane.b32.xlu0 %v416, 96
  %v440 = vpop.permute.xlu0 %439
  %v442 = vsel %vm232, %v409, %v420
  %v443 = vsel %vm281, %v442, %v424
  %v444 = vsel %vm283, %v443, %v428
  %v445 = vsel %vm232, %v413, %v432
  %v446 = vsel %vm281, %v445, %v436
  %v447 = vsel %vm283, %v446, %v440
  %v448 = vld [vmem:[#allocation2 + $0x46] sm:$0x1f]
  %v449 = vld [vmem:[#allocation2 + $0x47] sm:$0x1f]
  %v450 = vld [vmem:[#allocation2 + $0x48] sm:$0x1f]
  %452 = vrot.lane.b32.xlu0 %v413, 32
  %v453 = vpop.permute.xlu0 %452
  %455 = vrot.lane.b32.xlu0 %v414, 64
  %v456 = vpop.permute.xlu0 %455
  %458 = vrot.lane.b32.xlu0 %v415, 96
  %v459 = vpop.permute.xlu0 %458
  %462 = vrot.lane.b32.xlu0 %v417, 32
  %v463 = vpop.permute.xlu0 %462
  %466 = vrot.lane.b32.xlu0 %v448, 64
  %v467 = vpop.permute.xlu0 %466
  %470 = vrot.lane.b32.xlu0 %v449, 96
  %v471 = vpop.permute.xlu0 %470
  %v473 = vsel %vm232, %v412, %v453
  %v474 = vsel %vm281, %v473, %v456
  %v475 = vsel %vm283, %v474, %v459
  %v476 = vsel %vm232, %v416, %v463
  %v477 = vsel %vm281, %v476, %v467
  %v478 = vsel %vm283, %v477, %v471
  %v479 = vld [vmem:[#allocation2 + $0x4d] sm:$0x1f]
  %v480 = vld [vmem:[#allocation2 + $0x4e] sm:$0x1f]
  %v481 = vld [vmem:[#allocation2 + $0x4f] sm:$0x1f]
  %482 = vrot.lane.b32.xlu0 %v416, 32
  %v483 = vpop.permute.xlu0 %482
  %485 = vrot.lane.b32.xlu0 %v417, 64
  %v486 = vpop.permute.xlu0 %485
  %488 = vrot.lane.b32.xlu0 %v448, 96
  %v489 = vpop.permute.xlu0 %488
  %492 = vrot.lane.b32.xlu0 %v450, 32
  %v493 = vpop.permute.xlu0 %492
  %496 = vrot.lane.b32.xlu0 %v479, 64
  %v497 = vpop.permute.xlu0 %496
  %500 = vrot.lane.b32.xlu0 %v480, 96
  %v501 = vpop.permute.xlu0 %500
  %v503 = vsel %vm232, %v415, %v483
  %v504 = vsel %vm281, %v503, %v486
  %v505 = vsel %vm283, %v504, %v489
  %v506 = vsel %vm232, %v449, %v493
  %v507 = vsel %vm281, %v506, %v497
  %v508 = vsel %vm283, %v507, %v501
  %v509 = vld [vmem:[#allocation2 + $0x54] sm:$0x1f]
  %v510 = vld [vmem:[#allocation2 + $0x55] sm:$0x1f]
  %v511 = vld [vmem:[#allocation2 + $0x56] sm:$0x1f]
  %512 = vrot.lane.b32.xlu0 %v449, 32
  %v513 = vpop.permute.xlu0 %512
  %515 = vrot.lane.b32.xlu0 %v450, 64
  %v516 = vpop.permute.xlu0 %515
  %518 = vrot.lane.b32.xlu0 %v479, 96
  %v519 = vpop.permute.xlu0 %518
  %522 = vrot.lane.b32.xlu0 %v481, 32
  %v523 = vpop.permute.xlu0 %522
  %526 = vrot.lane.b32.xlu0 %v509, 64
  %v527 = vpop.permute.xlu0 %526
  %530 = vrot.lane.b32.xlu0 %v510, 96
  %v531 = vpop.permute.xlu0 %530
  %v533 = vsel %vm232, %v448, %v513
  %v534 = vsel %vm281, %v533, %v516
  %v535 = vsel %vm283, %v534, %v519
  %v536 = vsel %vm232, %v480, %v523
  %v537 = vsel %vm281, %v536, %v527
  %v538 = vsel %vm283, %v537, %v531
  %v539 = vld [vmem:[#allocation2 + $0x5b] sm:$0x1f]
  %v540 = vld [vmem:[#allocation2 + $0x5c] sm:$0x1f]
  %v541 = vld [vmem:[#allocation2 + $0x5d] sm:$0x1f]
  %542 = vrot.lane.b32.xlu0 %v480, 32
  %v543 = vpop.permute.xlu0 %542
  %545 = vrot.lane.b32.xlu0 %v481, 64
  %v546 = vpop.permute.xlu0 %545
  %548 = vrot.lane.b32.xlu0 %v509, 96
  %v549 = vpop.permute.xlu0 %548
  %552 = vrot.lane.b32.xlu0 %v511, 32
  %v553 = vpop.permute.xlu0 %552
  %556 = vrot.lane.b32.xlu0 %v539, 64
  %v557 = vpop.permute.xlu0 %556
  %560 = vrot.lane.b32.xlu0 %v540, 96
  %v561 = vpop.permute.xlu0 %560
  %v563 = vsel %vm232, %v479, %v543
  %v564 = vsel %vm281, %v563, %v546
  %v565 = vsel %vm283, %v564, %v549
  %v566 = vsel %vm232, %v510, %v553
  %v567 = vsel %vm281, %v566, %v557
  %v568 = vsel %vm283, %v567, %v561
  %v571 = vrot.slane %v315, 3
  %v572 = vrot.slane %v318, 3
  %v573 = vrot.slane %v290, 3
  %v579 = vrot.slane %v345, 6
  %v580 = vrot.slane %v348, 6
  %v581 = vrot.slane %v321, 6
  %v587 = vrot.slane %v375, 1
  %v588 = vrot.slane %v378, 1
  %v589 = vrot.slane %v351, 1
  %v596 = vrot.slane %v405, 4
  %v597 = vrot.slane %v408, 4
  %v598 = vrot.slane %v381, 4
  %v604 = vrot.slane %v444, 7
  %v605 = vrot.slane %v447, 7
  %v606 = vrot.slane %v417, 7
  %v612 = vrot.slane %v475, 2
  %v613 = vrot.slane %v478, 2
  %v614 = vrot.slane %v450, 2
  %v620 = vrot.slane %v505, 5
  %v621 = vrot.slane %v508, 5
  %v622 = vrot.slane %v481, 5
  %v629 = vrot.slane %v565, 3
  %v630 = vrot.slane %v568, 3
  %v631 = vrot.slane %v541, 3
  %vm635 = vcmask 1044480
  %v636 = vsel %vm635, %v284, %v571
  %v637 = vsel %vm635, %v287, %v572
  %v638 = vsel %vm635, %v255, %v573
  %vm639 = vcmask 1041408
  %v640 = vsel %vm639, %v571, %v579
  %v641 = vsel %vm639, %v572, %v580
  %v642 = vsel %vm639, %v573, %v581
  %vm643 = vcmask 1046528
  %v644 = vsel %vm643, %v640, %v587
  %v645 = vsel %vm643, %v641, %v588
  %v646 = vsel %vm643, %v642, %v589
  %v647 = vsel %vm85, %v587, %v596
  %v648 = vsel %vm85, %v588, %v597
  %v649 = vsel %vm85, %v589, %v598
  %vm650 = vcmask 1040384
  %v651 = vsel %vm650, %v596, %v604
  %v652 = vsel %vm650, %v597, %v605
  %v653 = vsel %vm650, %v598, %v606
  %vm654 = vcmask 1045504
  %v655 = vsel %vm654, %v651, %v612
  %v656 = vsel %vm654, %v652, %v613
  %v657 = vsel %vm654, %v653, %v614
  %vm658 = vcmask 1042432
  %v659 = vsel %vm658, %v612, %v620
  %v660 = vsel %vm658, %v613, %v621
  %v661 = vsel %vm658, %v614, %v622
  %v662 = vsel %vm635, %v535, %v629
  %v663 = vsel %vm635, %v538, %v630
  %v664 = vsel %vm635, %v511, %v631
  %v665 = vld [vmem:[%s3] sm:$0xff]
  %v666 = vld [vmem:[%s3 + $0x8] sm:$0xff]
  %v667 = vld [vmem:[%s3 + $0x10] sm:$0xff]
  %v668 = vld [vmem:[%s3 + $0x18] sm:$0xff]
  %v669 = vld [vmem:[%s3 + $0x20] sm:$0xff]
  %v670 = vld [vmem:[%s3 + $0x28] sm:$0xff]
  %v671 = vld [vmem:[%s3 + $0x30] sm:$0xff]
  %v672 = vld [vmem:[%s3 + $0x38] sm:$0xff]
  %v673 = vld [vmem:[%s3 + $0x40] sm:$0xff]
  %v674 = vld [vmem:[%s3 + $0x48] sm:$0xff]
  %v675 = vld [vmem:[%s3 + $0x50] sm:$0xff]
  %v676 = vld [vmem:[%s3 + $0x58] sm:$0xff]
  %v677 = vld [vmem:[%s3 + $0x60] sm:$0xff]
  %v678 = vld [vmem:[%s3 + $0x68] sm:$0xff]
  %v679 = vld [vmem:[%s3 + $0x70] sm:$0xff]
  %v680 = vld [vmem:[%s3 + $0x78] sm:$0xff]
  %v681 = vld [vmem:[%s3 + $0x80] sm:$0xff]
  %v682 = vld [vmem:[%s3 + $0x88] sm:$0xff]
  %v683 = vld [vmem:[%s3 + $0x90] sm:$0xff]
  %v684 = vld [vmem:[%s3 + $0x98] sm:$0xff]
  %v685 = vld [vmem:[%s3 + $0xa0] sm:$0xff]
  %v686 = vld [vmem:[%s3 + $0xa8] sm:$0xff]
  %v687 = vld [vmem:[%s3 + $0xb0] sm:$0xff]
  %v688 = vld [vmem:[%s3 + $0xb8] sm:$0xff]
  %v689 = vld [vmem:[%s3 + $0xc0] sm:$0xff]
  %v690 = vld [vmem:[%s3 + $0xc8] sm:$0xff]
  %v691 = vld [vmem:[%s3 + $0xd0] sm:$0xff]
  %v692 = vld [vmem:[%s3 + $0xd8] sm:$0xff]
  %v693 = vld [vmem:[%s3 + $0xe0] sm:$0xff]
  %v694 = vld [vmem:[%s3 + $0xe8] sm:$0xff]
  %v695 = vld [vmem:[%s3 + $0xf0] sm:$0xff]
  %v696 = vld [vmem:[%s3 + $0xf8] sm:$0xff]
  %v697 = vld [vmem:[%s3 + $0x100] sm:$0xff]
  %v698 = vld [vmem:[%s3 + $0x108] sm:$0xff]
  %v699 = vld [vmem:[%s3 + $0x110] sm:$0xff]
  %v700 = vld [vmem:[%s3 + $0x118] sm:$0xff]
  %v701 = vld [vmem:[%s4] sm:$0x1]
  %v703 = vlaneseq
  %v704 = vshrl.u32 %v703, 7
  %v705 = vsub.s32 0, %v704
  %v706 = vrot.slane %v701, %v705
  %v709 = vsel %vm232, %v638, 0
  %v712 = vsel %vm232, %v646, 0
  %v715 = vsel %vm232, %v649, 0
  %v718 = vsel %vm232, %v657, 0
  %v721 = vsel %vm232, %v661, 0
  %v724 = vsel %vm232, %v664, 0
  %v726 = vsel %vm232, %v631, 0
  %728 = vmatprep.subr.mxu0 0.0
  %729 = vmatpush1.msra.mxu0 %v680
  %730 = vmatprep.subr.mxu0 0.0
  %731 = vmatpush1.msra.mxu0 %v679
  %732 = vmatprep.subr.mxu0 0.0
  %733 = vmatpush1.msra.mxu0 %v678
  %734 = vmatprep.subr.mxu0 0.0
  %735 = vmatpush1.msra.mxu0 %v677
  %736 = vmatprep.subr.mxu0 0.0
  %737 = vmatpush1.msra.mxu0 %v676
  %738 = vmatprep.subr.mxu0 0.0
  %739 = vmatpush1.msra.mxu0 %v675
  %740 = vmatprep.subr.mxu0 0.0
  %741 = vmatpush1.msra.mxu0 %v674
  %742 = vmatprep.subr.mxu0 0.0
  %743 = vmatpush1.msra.mxu0 %v673
  %744 = vmatprep.subr.mxu0 0.0
  %745 = vmatpush1.msra.mxu0 %v672
  %746 = vmatprep.subr.mxu0 0.0
  %747 = vmatpush1.msra.mxu0 %v671
  %748 = vmatprep.subr.mxu0 0.0
  %749 = vmatpush1.msra.mxu0 %v670
  %750 = vmatprep.subr.mxu0 0.0
  %751 = vmatpush1.msra.mxu0 %v669
  %752 = vmatprep.subr.mxu0 0.0
  %753 = vmatpush1.msra.mxu0 %v668
  %754 = vmatprep.subr.mxu0 0.0
  %755 = vmatpush1.msra.mxu0 %v667
  %756 = vmatprep.subr.mxu0 0.0
  %757 = vmatpush1.msra.mxu0 %v666
  %758 = vmatprep.subr.mxu0 0.0
  %759 = vmatpush1.msra.mxu0 %v665
  %760 = vmatprep.subr.mxu0 0.0
  %761 = vmatpush2.msra.mxu0 %v696
  %762 = vmatprep.subr.mxu0 0.0
  %763 = vmatpush2.msra.mxu0 %v695
  %764 = vmatprep.subr.mxu0 0.0
  %765 = vmatpush2.msra.mxu0 %v694
  %766 = vmatprep.subr.mxu0 0.0
  %767 = vmatpush2.msra.mxu0 %v693
  %768 = vmatprep.subr.mxu0 0.0
  %769 = vmatpush2.msra.mxu0 %v692
  %770 = vmatprep.subr.mxu0 0.0
  %771 = vmatpush2.msra.mxu0 %v691
  %772 = vmatprep.subr.mxu0 0.0
  %773 = vmatpush2.msra.mxu0 %v690
  %774 = vmatprep.subr.mxu0 0.0
  %775 = vmatpush2.msra.mxu0 %v689
  %776 = vmatprep.subr.mxu0 0.0
  %777 = vmatpush2.msra.mxu0 %v688
  %778 = vmatprep.subr.mxu0 0.0
  %779 = vmatpush2.msra.mxu0 %v687
  %780 = vmatprep.subr.mxu0 0.0
  %781 = vmatpush2.msra.mxu0 %v686
  %782 = vmatprep.subr.mxu0 0.0
  %783 = vmatpush2.msra.mxu0 %v685
  %784 = vmatprep.subr.mxu0 0.0
  %785 = vmatpush2.msra.mxu0 %v684
  %786 = vmatprep.subr.mxu0 0.0
  %787 = vmatpush2.msra.mxu0 %v683
  %788 = vmatprep.subr.mxu0 0.0
  %789 = vmatpush2.msra.mxu0 %v682
  %790 = vmatprep.subr.mxu0 0.0
  %791 = vmatpush2.msra.mxu0 %v681
  %792 = vmatprep.mubr.f32.mxu0 %v637
  %793 = vmatmul.mubr.f32.gmra.mxu0 %v636
  %v794 = vpop.f32.mrf.mxu0
  %v795 = vadd.f32 %v706, %v794
  %v796 = vpop.f32.mrf.mxu0
  %797 = vmatprep.mubr.f32.mxu0 %v645
  %798 = vmatmul.mubr.f32.gmra.mxu0 %v644
  %v799 = vpop.f32.mrf.mxu0
  %v800 = vadd.f32 %v706, %v799
  %v801 = vpop.f32.mrf.mxu0
  %802 = vmatprep.mubr.f32.mxu0 %v648
  %803 = vmatmul.mubr.f32.gmra.mxu0 %v647
  %v804 = vpop.f32.mrf.mxu0
  %v805 = vadd.f32 %v706, %v804
  %v806 = vpop.f32.mrf.mxu0
  %807 = vmatprep.mubr.f32.mxu0 %v656
  %808 = vmatmul.mubr.f32.gmra.mxu0 %v655
  %v809 = vpop.f32.mrf.mxu0
  %v810 = vadd.f32 %v706, %v809
  %v811 = vpop.f32.mrf.mxu0
  %812 = vmatprep.mubr.f32.mxu0 %v660
  %813 = vmatmul.mubr.f32.gmra.mxu0 %v659
  %v814 = vpop.f32.mrf.mxu0
  %v815 = vadd.f32 %v706, %v814
  %v816 = vpop.f32.mrf.mxu0
  %817 = vmatprep.mubr.f32.mxu0 %v663
  %818 = vmatmul.mubr.f32.gmra.mxu0 %v662
  %v819 = vpop.f32.mrf.mxu0
  %v820 = vadd.f32 %v706, %v819
  %v821 = vpop.f32.mrf.mxu0
  %822 = vmatprep.mubr.f32.mxu0 %v630
  %823 = vmatmul.mubr.f32.gmra.mxu0 %v629
  %v824 = vpop.f32.mrf.mxu0
  %v825 = vadd.f32 %v706, %v824
  %v826 = vpop.f32.mrf.mxu0
  %827 = vdwg.mxu0
  %828 = vmatprep.subr.mxu0 0.0
  %829 = vmatpush1.msra.mxu0 0.0
  %830 = vmatprep.subr.mxu0 0.0
  %831 = vmatpush1.msra.mxu0 0.0
  %832 = vmatprep.subr.mxu0 0.0
  %833 = vmatpush1.msra.mxu0 0.0
  %834 = vmatprep.subr.mxu0 0.0
  %835 = vmatpush1.msra.mxu0 0.0
  %836 = vmatprep.subr.mxu0 0.0
  %837 = vmatpush1.msra.mxu0 0.0
  %838 = vmatprep.subr.mxu0 0.0
  %839 = vmatpush1.msra.mxu0 0.0
  %840 = vmatprep.subr.mxu0 0.0
  %841 = vmatpush1.msra.mxu0 0.0
  %842 = vmatprep.subr.mxu0 0.0
  %843 = vmatpush1.msra.mxu0 0.0
  %844 = vmatprep.subr.mxu0 0.0
  %845 = vmatpush1.msra.mxu0 0.0
  %846 = vmatprep.subr.mxu0 0.0
  %847 = vmatpush1.msra.mxu0 0.0
  %848 = vmatprep.subr.mxu0 0.0
  %849 = vmatpush1.msra.mxu0 0.0
  %850 = vmatprep.subr.mxu0 0.0
  %851 = vmatpush1.msra.mxu0 0.0
  %852 = vmatprep.subr.mxu0 0.0
  %853 = vmatpush1.msra.mxu0 %v700
  %854 = vmatprep.subr.mxu0 0.0
  %855 = vmatpush1.msra.mxu0 %v699
  %856 = vmatprep.subr.mxu0 0.0
  %857 = vmatpush1.msra.mxu0 %v698
  %858 = vmatprep.subr.mxu0 0.0
  %859 = vmatpush1.msra.mxu0 %v697
  %860 = vmatprep.subr.mxu0 0.0
  %861 = vmatpush2.msra.mxu0 0.0
  %862 = vmatprep.subr.mxu0 0.0
  %863 = vmatpush2.msra.mxu0 0.0
  %864 = vmatprep.subr.mxu0 0.0
  %865 = vmatpush2.msra.mxu0 0.0
  %866 = vmatprep.subr.mxu0 0.0
  %867 = vmatpush2.msra.mxu0 0.0
  %868 = vmatprep.subr.mxu0 0.0
  %869 = vmatpush2.msra.mxu0 0.0
  %870 = vmatprep.subr.mxu0 0.0
  %871 = vmatpush2.msra.mxu0 0.0
  %872 = vmatprep.subr.mxu0 0.0
  %873 = vmatpush2.msra.mxu0 0.0
  %874 = vmatprep.subr.mxu0 0.0
  %875 = vmatpush2.msra.mxu0 0.0
  %876 = vmatprep.subr.mxu0 0.0
  %877 = vmatpush2.msra.mxu0 0.0
  %878 = vmatprep.subr.mxu0 0.0
  %879 = vmatpush2.msra.mxu0 0.0
  %880 = vmatprep.subr.mxu0 0.0
  %881 = vmatpush2.msra.mxu0 0.0
  %882 = vmatprep.subr.mxu0 0.0
  %883 = vmatpush2.msra.mxu0 0.0
  %884 = vmatprep.subr.mxu0 0.0
  %885 = vmatpush2.msra.mxu0 0.0
  %886 = vmatprep.subr.mxu0 0.0
  %887 = vmatpush2.msra.mxu0 0.0
  %888 = vmatprep.subr.mxu0 0.0
  %889 = vmatpush2.msra.mxu0 0.0
  %890 = vmatprep.subr.mxu0 0.0
  %891 = vmatpush2.msra.mxu0 0.0
  %892 = vmatprep.mubr.f32.mxu0 0.0
  %893 = vmatmul.mubr.f32.gmra.mxu0 %v709
  %v894 = vpop.f32.mrf.mxu0
  %v895 = vadd.f32 %v795, %v894
  %v896 = vpop.f32.mrf.mxu0
  %897 = vmatprep.mubr.f32.mxu0 0.0
  %898 = vmatmul.mubr.f32.gmra.mxu0 %v712
  %v899 = vpop.f32.mrf.mxu0
  %v900 = vadd.f32 %v800, %v899
  %v901 = vpop.f32.mrf.mxu0
  %902 = vmatprep.mubr.f32.mxu0 0.0
  %903 = vmatmul.mubr.f32.gmra.mxu0 %v715
  %v904 = vpop.f32.mrf.mxu0
  %v905 = vadd.f32 %v805, %v904
  %v906 = vpop.f32.mrf.mxu0
  %907 = vmatprep.mubr.f32.mxu0 0.0
  %908 = vmatmul.mubr.f32.gmra.mxu0 %v718
  %v909 = vpop.f32.mrf.mxu0
  %v910 = vadd.f32 %v810, %v909
  %v911 = vpop.f32.mrf.mxu0
  %912 = vmatprep.mubr.f32.mxu0 0.0
  %913 = vmatmul.mubr.f32.gmra.mxu0 %v721
  %v914 = vpop.f32.mrf.mxu0
  %v915 = vadd.f32 %v815, %v914
  %v916 = vpop.f32.mrf.mxu0
  %917 = vmatprep.mubr.f32.mxu0 0.0
  %918 = vmatmul.mubr.f32.gmra.mxu0 %v724
  %v919 = vpop.f32.mrf.mxu0
  %v920 = vadd.f32 %v820, %v919
  %v921 = vpop.f32.mrf.mxu0
  %922 = vmatprep.mubr.f32.mxu0 0.0
  %923 = vmatmul.mubr.f32.gmra.mxu0 %v726
  %v924 = vpop.f32.mrf.mxu0
  %v925 = vadd.f32 %v825, %v924
  %v926 = vpop.f32.mrf.mxu0
  %927 = vdwg.mxu0
  %v928 = vmax.f32 %v895, 0.0
  %v929 = vmax.f32 %v900, 0.0
  %v930 = vmax.f32 %v905, 0.0
  %v931 = vmax.f32 %v910, 0.0
  %v932 = vmax.f32 %v915, 0.0
  %v933 = vmax.f32 %v920, 0.0
  %v934 = vmax.f32 %v925, 0.0
  %935 = vst.msk [vmem:[%s5] sm:$0xff] %vm232, %v928
  %936 = vst.msk [vmem:[%s5 + $0x8] sm:$0xff] %vm232, %v929
  %937 = vst.msk [vmem:[%s5 + $0x10] sm:$0xff] %vm232, %v930
  %938 = vst.msk [vmem:[%s5 + $0x18] sm:$0xff] %vm232, %v931
  %939 = vst.msk [vmem:[%s5 + $0x20] sm:$0xff] %vm232, %v932
  %940 = vst.msk [vmem:[%s5 + $0x28] sm:$0xff] %vm232, %v933
  %941 = vst.msk [vmem:[%s5 + $0x30] sm:$0x3] %vm245, %v934
  // Predicated region
  $region22: #{sac_ae_actor_forward.2} parent=0 // pred_check
    _
  $region23: #{sac_ae_actor_forward.2} parent=0 // pred_check_branch
    %943 = sbr.rel (0) target = $region25
  $region24: #{sac_ae_actor_forward.2} parent=0 // pred_region
    _
  $region25: #{sac_ae_actor_forward.2} parent=0 // pred_fallthru
    _
  // Predicated region
  $region26: #{sac_ae_actor_forward.2} parent=0 // pred_check
    _
  $region27: #{sac_ae_actor_forward.2} parent=0 // pred_check_branch
    %945 = sbr.rel (0) target = $region29
  $region28: #{sac_ae_actor_forward.2} parent=0 // pred_region
    _
  $region29: #{sac_ae_actor_forward.2} parent=0 // pred_fallthru
    _

// kernel: sac_ae_actor_forward.3
$region0: #{sac_ae_actor_forward.3}
  #allocation0 [shape = 'u32[]', space=smem, size = 0x4, offset = 0x4, fixed_abs, tag = 'smem constant byte address 0x4 - core index']
  #allocation1 [shape = 'u32[144,128]{1,0:T(1,128)}', space=vmem, size = 0x12000, scoped, tag = 'internal scratch']
  %s0 = inlined_call_operand.vmem [shape: f32[2,800], index: 0, kind: input, shape index: {}]
  %s1 = inlined_call_operand.vmem [shape: f32[800,50], index: 1, kind: input, shape index: {}]
  %s2 = inlined_call_operand.vmem [shape: f32[1,50], index: 2, kind: input, shape index: {}]
  %s3 = inlined_call_operand.vmem [shape: f32[1,50], index: 3, kind: input, shape index: {}]
  %s4 = inlined_call_operand.vmem [shape: f32[1,50], index: 4, kind: input, shape index: {}]
  %s5 = inlined_call_operand.vmem [shape: f32[50,256], index: 5, kind: input, shape index: {}]
  %s6 = inlined_call_operand.vmem [shape: f32[1,256], index: 6, kind: input, shape index: {}]
  %s7 = inlined_call_operand.vmem [shape: f32[256,256], index: 7, kind: input, shape index: {}]
  %s8 = inlined_call_operand.vmem [shape: f32[1,256], index: 8, kind: input, shape index: {}]
  %s9 = inlined_call_operand.vmem [shape: f32[256,6], index: 9, kind: input, shape index: {}]
  %s10 = inlined_call_operand.vmem [shape: f32[1,6], index: 10, kind: input, shape index: {}]
  %s11 = inlined_call_operand.vmem [shape: f32[256,6], index: 11, kind: input, shape index: {}]
  %s12 = inlined_call_operand.vmem [shape: f32[1,6], index: 12, kind: input, shape index: {}]
  %s13 = inlined_call_operand.vmem [shape: f32[2,6], index: 13, kind: input, shape index: {}]
  %s14 = inlined_call_operand.vmem [shape: f32[1,6], index: 14, kind: input, shape index: {}]
  %s15 = inlined_call_operand.vmem [shape: f32[1,6], index: 15, kind: input, shape index: {}]
  %s16 = inlined_call_operand.vmem [shape: f32[2,128], index: 16, kind: output, shape index: {}]
  %s17 = sld [smem:[#allocation0]]
  $region74: #{sac_ae_actor_forward.3} parent=0
    _
  %s19 = ssub.s32 1, %s17
  %s20 = scalar_select 0, %s19, %s17
  // Predicated region
  $region2: #{sac_ae_actor_forward.3} parent=0 // pred_check
    _
  $region3: #{sac_ae_actor_forward.3} parent=0 // pred_check_branch
    %22 = sbr.rel (0) target = $region5
  $region4: #{sac_ae_actor_forward.3} parent=0 // pred_region
    _
  $region5: #{sac_ae_actor_forward.3} parent=0 // pred_fallthru
    _
  // Predicated region
  $region6: #{sac_ae_actor_forward.3} parent=0 // pred_check
    _
  $region7: #{sac_ae_actor_forward.3} parent=0 // pred_check_branch
    %24 = sbr.rel (0) target = $region9
  $region8: #{sac_ae_actor_forward.3} parent=0 // pred_region
    _
  $region9: #{sac_ae_actor_forward.3} parent=0 // pred_fallthru
    _
  // Predicated region
  $region10: #{sac_ae_actor_forward.3} parent=0 // pred_check
    _
  $region11: #{sac_ae_actor_forward.3} parent=0 // pred_check_branch
    %26 = sbr.rel (0) target = $region13
  $region12: #{sac_ae_actor_forward.3} parent=0 // pred_region
    _
  $region13: #{sac_ae_actor_forward.3} parent=0 // pred_fallthru
    _
  // Predicated region
  $region14: #{sac_ae_actor_forward.3} parent=0 // pred_check
    _
  $region15: #{sac_ae_actor_forward.3} parent=0 // pred_check_branch
    %28 = sbr.rel (0) target = $region17
  $region16: #{sac_ae_actor_forward.3} parent=0 // pred_region
    _
  $region17: #{sac_ae_actor_forward.3} parent=0 // pred_fallthru
    _
  // Predicated region
  $region18: #{sac_ae_actor_forward.3} parent=0 // pred_check
    _
  $region19: #{sac_ae_actor_forward.3} parent=0 // pred_check_branch
    %30 = sbr.rel (0) target = $region21
  $region20: #{sac_ae_actor_forward.3} parent=0 // pred_region
    _
  $region21: #{sac_ae_actor_forward.3} parent=0 // pred_fallthru
    _
  // Predicated region
  $region22: #{sac_ae_actor_forward.3} parent=0 // pred_check
    _
  $region23: #{sac_ae_actor_forward.3} parent=0 // pred_check_branch
    %32 = sbr.rel (0) target = $region25
  $region24: #{sac_ae_actor_forward.3} parent=0 // pred_region
    _
  $region25: #{sac_ae_actor_forward.3} parent=0 // pred_fallthru
    _
  // Predicated region
  $region26: #{sac_ae_actor_forward.3} parent=0 // pred_check
    _
  $region27: #{sac_ae_actor_forward.3} parent=0 // pred_check_branch
    %34 = sbr.rel (0) target = $region29
  $region28: #{sac_ae_actor_forward.3} parent=0 // pred_region
    _
  $region29: #{sac_ae_actor_forward.3} parent=0 // pred_fallthru
    _
  // Predicated region
  $region30: #{sac_ae_actor_forward.3} parent=0 // pred_check
    _
  $region31: #{sac_ae_actor_forward.3} parent=0 // pred_check_branch
    %36 = sbr.rel (0) target = $region33
  $region32: #{sac_ae_actor_forward.3} parent=0 // pred_region
    _
  $region33: #{sac_ae_actor_forward.3} parent=0 // pred_fallthru
    _
  // Predicated region
  $region34: #{sac_ae_actor_forward.3} parent=0 // pred_check
    _
  $region35: #{sac_ae_actor_forward.3} parent=0 // pred_check_branch
    %38 = sbr.rel (0) target = $region37
  $region36: #{sac_ae_actor_forward.3} parent=0 // pred_region
    _
  $region37: #{sac_ae_actor_forward.3} parent=0 // pred_fallthru
    _
  // Predicated region
  $region38: #{sac_ae_actor_forward.3} parent=0 // pred_check
    _
  $region39: #{sac_ae_actor_forward.3} parent=0 // pred_check_branch
    %40 = sbr.rel (0) target = $region41
  $region40: #{sac_ae_actor_forward.3} parent=0 // pred_region
    _
  $region41: #{sac_ae_actor_forward.3} parent=0 // pred_fallthru
    _
  // Predicated region
  $region42: #{sac_ae_actor_forward.3} parent=0 // pred_check
    _
  $region43: #{sac_ae_actor_forward.3} parent=0 // pred_check_branch
    %42 = sbr.rel (0) target = $region45
  $region44: #{sac_ae_actor_forward.3} parent=0 // pred_region
    _
  $region45: #{sac_ae_actor_forward.3} parent=0 // pred_fallthru
    _
  // Predicated region
  $region46: #{sac_ae_actor_forward.3} parent=0 // pred_check
    _
  $region47: #{sac_ae_actor_forward.3} parent=0 // pred_check_branch
    %44 = sbr.rel (0) target = $region49
  $region48: #{sac_ae_actor_forward.3} parent=0 // pred_region
    _
  $region49: #{sac_ae_actor_forward.3} parent=0 // pred_fallthru
    _
  // Predicated region
  $region50: #{sac_ae_actor_forward.3} parent=0 // pred_check
    _
  $region51: #{sac_ae_actor_forward.3} parent=0 // pred_check_branch
    %46 = sbr.rel (0) target = $region53
  $region52: #{sac_ae_actor_forward.3} parent=0 // pred_region
    _
  $region53: #{sac_ae_actor_forward.3} parent=0 // pred_fallthru
    _
  // Predicated region
  $region54: #{sac_ae_actor_forward.3} parent=0 // pred_check
    _
  $region55: #{sac_ae_actor_forward.3} parent=0 // pred_check_branch
    %48 = sbr.rel (0) target = $region57
  $region56: #{sac_ae_actor_forward.3} parent=0 // pred_region
    _
  $region57: #{sac_ae_actor_forward.3} parent=0 // pred_fallthru
    _
  // Predicated region
  $region58: #{sac_ae_actor_forward.3} parent=0 // pred_check
    _
  $region59: #{sac_ae_actor_forward.3} parent=0 // pred_check_branch
    %50 = sbr.rel (0) target = $region61
  $region60: #{sac_ae_actor_forward.3} parent=0 // pred_region
    _
  $region61: #{sac_ae_actor_forward.3} parent=0 // pred_fallthru
    _
  // Predicated region
  $region62: #{sac_ae_actor_forward.3} parent=0 // pred_check
    _
  $region63: #{sac_ae_actor_forward.3} parent=0 // pred_check_branch
    %52 = sbr.rel (0) target = $region65
  $region64: #{sac_ae_actor_forward.3} parent=0 // pred_region
    _
  $region65: #{sac_ae_actor_forward.3} parent=0 // pred_fallthru
    _
  %v53 = vld [vmem:[%s0] sm:$0xff]
  %v54 = vld [vmem:[%s0 + $0x8] sm:$0x3f]
  %v55 = vld [vmem:[%s1] sm:$0xff]
  %v56 = vld [vmem:[%s1 + $0x8] sm:$0xff]
  %v57 = vld [vmem:[%s1 + $0x10] sm:$0xff]
  %v58 = vld [vmem:[%s1 + $0x18] sm:$0xff]
  %v59 = vld [vmem:[%s1 + $0x20] sm:$0xff]
  %v60 = vld [vmem:[%s1 + $0x28] sm:$0xff]
  %v61 = vld [vmem:[%s1 + $0x30] sm:$0xff]
  %v62 = vld [vmem:[%s1 + $0x38] sm:$0xff]
  %v63 = vld [vmem:[%s1 + $0x40] sm:$0xff]
  %v64 = vld [vmem:[%s1 + $0x48] sm:$0xff]
  %v65 = vld [vmem:[%s1 + $0x50] sm:$0xff]
  %v66 = vld [vmem:[%s1 + $0x58] sm:$0xff]
  %v67 = vld [vmem:[%s1 + $0x60] sm:$0xff]
  %v68 = vld [vmem:[%s1 + $0x68] sm:$0xff]
  %v69 = vld [vmem:[%s1 + $0x70] sm:$0xff]
  %v70 = vld [vmem:[%s1 + $0x78] sm:$0xff]
  %v71 = vld [vmem:[%s1 + $0x80] sm:$0xff]
  %v72 = vld [vmem:[%s1 + $0x88] sm:$0xff]
  %v73 = vld [vmem:[%s1 + $0x90] sm:$0xff]
  %v74 = vld [vmem:[%s1 + $0x98] sm:$0xff]
  %v75 = vld [vmem:[%s1 + $0xa0] sm:$0xff]
  %v76 = vld [vmem:[%s1 + $0xa8] sm:$0xff]
  %v77 = vld [vmem:[%s1 + $0xb0] sm:$0xff]
  %v78 = vld [vmem:[%s1 + $0xb8] sm:$0xff]
  %v79 = vld [vmem:[%s1 + $0xc0] sm:$0xff]
  %v80 = vld [vmem:[%s1 + $0xc8] sm:$0xff]
  %v81 = vld [vmem:[%s1 + $0xd0] sm:$0xff]
  %v82 = vld [vmem:[%s1 + $0xd8] sm:$0xff]
  %v83 = vld [vmem:[%s1 + $0xe0] sm:$0xff]
  %v84 = vld [vmem:[%s1 + $0xe8] sm:$0xff]
  %v85 = vld [vmem:[%s1 + $0xf0] sm:$0xff]
  %v86 = vld [vmem:[%s1 + $0xf8] sm:$0xff]
  %v87 = vld [vmem:[%s1 + $0x100] sm:$0xff]
  %v88 = vld [vmem:[%s1 + $0x108] sm:$0xff]
  %v89 = vld [vmem:[%s1 + $0x110] sm:$0xff]
  %v90 = vld [vmem:[%s1 + $0x118] sm:$0xff]
  %v91 = vld [vmem:[%s1 + $0x120] sm:$0xff]
  %v92 = vld [vmem:[%s1 + $0x128] sm:$0xff]
  %v93 = vld [vmem:[%s1 + $0x130] sm:$0xff]
  %v94 = vld [vmem:[%s1 + $0x138] sm:$0xff]
  %v95 = vld [vmem:[%s1 + $0x140] sm:$0xff]
  %v96 = vld [vmem:[%s1 + $0x148] sm:$0xff]
  %v97 = vld [vmem:[%s1 + $0x150] sm:$0xff]
  %v98 = vld [vmem:[%s1 + $0x158] sm:$0xff]
  %v99 = vld [vmem:[%s1 + $0x160] sm:$0xff]
  %v100 = vld [vmem:[%s1 + $0x168] sm:$0xff]
  %v101 = vld [vmem:[%s1 + $0x170] sm:$0xff]
  %v102 = vld [vmem:[%s1 + $0x178] sm:$0xff]
  %v103 = vld [vmem:[%s1 + $0x180] sm:$0xff]
  %v104 = vld [vmem:[%s1 + $0x188] sm:$0xff]
  %v105 = vld [vmem:[%s1 + $0x190] sm:$0xff]
  %v106 = vld [vmem:[%s1 + $0x198] sm:$0xff]
  %v107 = vld [vmem:[%s1 + $0x1a0] sm:$0xff]
  %v108 = vld [vmem:[%s1 + $0x1a8] sm:$0xff]
  %v109 = vld [vmem:[%s1 + $0x1b0] sm:$0xff]
  %v110 = vld [vmem:[%s1 + $0x1b8] sm:$0xff]
  %v111 = vld [vmem:[%s1 + $0x1c0] sm:$0xff]
  %v112 = vld [vmem:[%s1 + $0x1c8] sm:$0xff]
  %v113 = vld [vmem:[%s1 + $0x1d0] sm:$0xff]
  %v114 = vld [vmem:[%s1 + $0x1d8] sm:$0xff]
  %v115 = vld [vmem:[%s1 + $0x1e0] sm:$0xff]
  %v116 = vld [vmem:[%s1 + $0x1e8] sm:$0xff]
  %v117 = vld [vmem:[%s1 + $0x1f0] sm:$0xff]
  %v118 = vld [vmem:[%s1 + $0x1f8] sm:$0xff]
  %v119 = vld [vmem:[%s1 + $0x200] sm:$0xff]
  %v120 = vld [vmem:[%s1 + $0x208] sm:$0xff]
  %v121 = vld [vmem:[%s1 + $0x210] sm:$0xff]
  %v122 = vld [vmem:[%s1 + $0x218] sm:$0xff]
  %v123 = vld [vmem:[%s1 + $0x220] sm:$0xff]
  %v124 = vld [vmem:[%s1 + $0x228] sm:$0xff]
  %v125 = vld [vmem:[%s1 + $0x230] sm:$0xff]
  %v126 = vld [vmem:[%s1 + $0x238] sm:$0xff]
  %v127 = vld [vmem:[%s1 + $0x240] sm:$0xff]
  %v128 = vld [vmem:[%s1 + $0x248] sm:$0xff]
  %v129 = vld [vmem:[%s1 + $0x250] sm:$0xff]
  %v130 = vld [vmem:[%s1 + $0x258] sm:$0xff]
  %v131 = vld [vmem:[%s1 + $0x260] sm:$0xff]
  %v132 = vld [vmem:[%s1 + $0x268] sm:$0xff]
  %v133 = vld [vmem:[%s1 + $0x270] sm:$0xff]
  %v134 = vld [vmem:[%s1 + $0x278] sm:$0xff]
  %v135 = vld [vmem:[%s1 + $0x280] sm:$0xff]
  %v136 = vld [vmem:[%s1 + $0x288] sm:$0xff]
  %v137 = vld [vmem:[%s1 + $0x290] sm:$0xff]
  %v138 = vld [vmem:[%s1 + $0x298] sm:$0xff]
  %v139 = vld [vmem:[%s1 + $0x2a0] sm:$0xff]
  %v140 = vld [vmem:[%s1 + $0x2a8] sm:$0xff]
  %v141 = vld [vmem:[%s1 + $0x2b0] sm:$0xff]
  %v142 = vld [vmem:[%s1 + $0x2b8] sm:$0xff]
  %v143 = vld [vmem:[%s1 + $0x2c0] sm:$0xff]
  %v144 = vld [vmem:[%s1 + $0x2c8] sm:$0xff]
  %v145 = vld [vmem:[%s1 + $0x2d0] sm:$0xff]
  %v146 = vld [vmem:[%s1 + $0x2d8] sm:$0xff]
  %v147 = vld [vmem:[%s1 + $0x2e0] sm:$0xff]
  %v148 = vld [vmem:[%s1 + $0x2e8] sm:$0xff]
  %v149 = vld [vmem:[%s1 + $0x2f0] sm:$0xff]
  %v150 = vld [vmem:[%s1 + $0x2f8] sm:$0xff]
  %v151 = vld [vmem:[%s1 + $0x300] sm:$0xff]
  %v152 = vld [vmem:[%s1 + $0x308] sm:$0xff]
  %v153 = vld [vmem:[%s1 + $0x310] sm:$0xff]
  %v154 = vld [vmem:[%s1 + $0x318] sm:$0xff]
  %v155 = vld [vmem:[%s2] sm:$0x1]
  %v157 = vlaneseq
  %v158 = vshrl.u32 %v157, 7
  %v159 = vsub.s32 0, %v158
  %v160 = vrot.slane %v155, %v159
  %v164 = vcombine.high %v53, %v53
  %v166 = vunpack.c.l.s4 1983009808
  %v167 = vunpack.c.0.s8 %v166
  %v168 = vlaneseq
  %v169 = vshrl.u32 %v168, 7
  %v170 = vsub.s32 %v167, %v169
  %v171 = vrot.slane %v53, %v170
  %v173 = vunpack.c.l.s4 1983009808
  %v174 = vunpack.c.0.s8 %v173
  %v175 = vlaneseq
  %v176 = vshrl.u32 %v175, 7
  %v177 = vsub.s32 %v174, %v176
  %v178 = vrot.slane %v164, %v177
  %v179 = vcombine.high %v171, %v171
  %v180 = vcombine.high %v178, %v178
  %v181 = vcombine.high %v54, %v54
  %v183 = vunpack.c.l.s4 1983009808
  %v184 = vunpack.c.0.s8 %v183
  %v185 = vlaneseq
  %v186 = vshrl.u32 %v185, 7
  %v187 = vsub.s32 %v184, %v186
  %v188 = vrot.slane %v54, %v187
  %v190 = vunpack.c.l.s4 1983009808
  %v191 = vunpack.c.0.s8 %v190
  %v192 = vlaneseq
  %v193 = vshrl.u32 %v192, 7
  %v194 = vsub.s32 %v191, %v193
  %v195 = vrot.slane %v181, %v194
  %v196 = vcombine.high %v188, %v188
  %vm203 = vcmask 261120
  %v204 = vsel %vm203, %v195, 0
  %206 = vmatprep.subr.mxu0 0.0
  %207 = vmatpush1.msra.mxu0 %v70
  %208 = vmatprep.subr.mxu0 0.0
  %209 = vmatpush1.msra.mxu0 %v69
  %210 = vmatprep.subr.mxu0 0.0
  %211 = vmatpush1.msra.mxu0 %v68
  %212 = vmatprep.subr.mxu0 0.0
  %213 = vmatpush1.msra.mxu0 %v67
  %214 = vmatprep.subr.mxu0 0.0
  %215 = vmatpush1.msra.mxu0 %v66
  %216 = vmatprep.subr.mxu0 0.0
  %217 = vmatpush1.msra.mxu0 %v65
  %218 = vmatprep.subr.mxu0 0.0
  %219 = vmatpush1.msra.mxu0 %v64
  %220 = vmatprep.subr.mxu0 0.0
  %221 = vmatpush1.msra.mxu0 %v63
  %222 = vmatprep.subr.mxu0 0.0
  %223 = vmatpush1.msra.mxu0 %v62
  %224 = vmatprep.subr.mxu0 0.0
  %225 = vmatpush1.msra.mxu0 %v61
  %226 = vmatprep.subr.mxu0 0.0
  %227 = vmatpush1.msra.mxu0 %v60
  %228 = vmatprep.subr.mxu0 0.0
  %229 = vmatpush1.msra.mxu0 %v59
  %230 = vmatprep.subr.mxu0 0.0
  %231 = vmatpush1.msra.mxu0 %v58
  %232 = vmatprep.subr.mxu0 0.0
  %233 = vmatpush1.msra.mxu0 %v57
  %234 = vmatprep.subr.mxu0 0.0
  %235 = vmatpush1.msra.mxu0 %v56
  %236 = vmatprep.subr.mxu0 0.0
  %237 = vmatpush1.msra.mxu0 %v55
  %238 = vmatprep.subr.mxu0 0.0
  %239 = vmatpush2.msra.mxu0 %v86
  %240 = vmatprep.subr.mxu0 0.0
  %241 = vmatpush2.msra.mxu0 %v85
  %242 = vmatprep.subr.mxu0 0.0
  %243 = vmatpush2.msra.mxu0 %v84
  %244 = vmatprep.subr.mxu0 0.0
  %245 = vmatpush2.msra.mxu0 %v83
  %246 = vmatprep.subr.mxu0 0.0
  %247 = vmatpush2.msra.mxu0 %v82
  %248 = vmatprep.subr.mxu0 0.0
  %249 = vmatpush2.msra.mxu0 %v81
  %250 = vmatprep.subr.mxu0 0.0
  %251 = vmatpush2.msra.mxu0 %v80
  %252 = vmatprep.subr.mxu0 0.0
  %253 = vmatpush2.msra.mxu0 %v79
  %254 = vmatprep.subr.mxu0 0.0
  %255 = vmatpush2.msra.mxu0 %v78
  %256 = vmatprep.subr.mxu0 0.0
  %257 = vmatpush2.msra.mxu0 %v77
  %258 = vmatprep.subr.mxu0 0.0
  %259 = vmatpush2.msra.mxu0 %v76
  %260 = vmatprep.subr.mxu0 0.0
  %261 = vmatpush2.msra.mxu0 %v75
  %262 = vmatprep.subr.mxu0 0.0
  %263 = vmatpush2.msra.mxu0 %v74
  %264 = vmatprep.subr.mxu0 0.0
  %265 = vmatpush2.msra.mxu0 %v73
  %266 = vmatprep.subr.mxu0 0.0
  %267 = vmatpush2.msra.mxu0 %v72
  %268 = vmatprep.subr.mxu0 0.0
  %269 = vmatpush2.msra.mxu0 %v71
  %270 = vmatprep.mubr.f32.mxu0 %v179
  %271 = vmatmul.mubr.f32.gmra.mxu0 %v171
  %v272 = vpop.f32.mrf.mxu0
  %v273 = vadd.f32 %v160, %v272
  %v274 = vpop.f32.mrf.mxu0
  %275 = vdwg.mxu0
  %276 = vmatprep.subr.mxu0 0.0
  %277 = vmatpush1.msra.mxu0 %v102
  %278 = vmatprep.subr.mxu0 0.0
  %279 = vmatpush1.msra.mxu0 %v101
  %280 = vmatprep.subr.mxu0 0.0
  %281 = vmatpush1.msra.mxu0 %v100
  %282 = vmatprep.subr.mxu0 0.0
  %283 = vmatpush1.msra.mxu0 %v99
  %284 = vmatprep.subr.mxu0 0.0
  %285 = vmatpush1.msra.mxu0 %v98
  %286 = vmatprep.subr.mxu0 0.0
  %287 = vmatpush1.msra.mxu0 %v97
  %288 = vmatprep.subr.mxu0 0.0
  %289 = vmatpush1.msra.mxu0 %v96
  %290 = vmatprep.subr.mxu0 0.0
  %291 = vmatpush1.msra.mxu0 %v95
  %292 = vmatprep.subr.mxu0 0.0
  %293 = vmatpush1.msra.mxu0 %v94
  %294 = vmatprep.subr.mxu0 0.0
  %295 = vmatpush1.msra.mxu0 %v93
  %296 = vmatprep.subr.mxu0 0.0
  %297 = vmatpush1.msra.mxu0 %v92
  %298 = vmatprep.subr.mxu0 0.0
  %299 = vmatpush1.msra.mxu0 %v91
  %300 = vmatprep.subr.mxu0 0.0
  %301 = vmatpush1.msra.mxu0 %v90
  %302 = vmatprep.subr.mxu0 0.0
  %303 = vmatpush1.msra.mxu0 %v89
  %304 = vmatprep.subr.mxu0 0.0
  %305 = vmatpush1.msra.mxu0 %v88
  %306 = vmatprep.subr.mxu0 0.0
  %307 = vmatpush1.msra.mxu0 %v87
  %308 = vmatprep.subr.mxu0 0.0
  %309 = vmatpush2.msra.mxu0 %v118
  %310 = vmatprep.subr.mxu0 0.0
  %311 = vmatpush2.msra.mxu0 %v117
  %312 = vmatprep.subr.mxu0 0.0
  %313 = vmatpush2.msra.mxu0 %v116
  %314 = vmatprep.subr.mxu0 0.0
  %315 = vmatpush2.msra.mxu0 %v115
  %316 = vmatprep.subr.mxu0 0.0
  %317 = vmatpush2.msra.mxu0 %v114
  %318 = vmatprep.subr.mxu0 0.0
  %319 = vmatpush2.msra.mxu0 %v113
  %320 = vmatprep.subr.mxu0 0.0
  %321 = vmatpush2.msra.mxu0 %v112
  %322 = vmatprep.subr.mxu0 0.0
  %323 = vmatpush2.msra.mxu0 %v111
  %324 = vmatprep.subr.mxu0 0.0
  %325 = vmatpush2.msra.mxu0 %v110
  %326 = vmatprep.subr.mxu0 0.0
  %327 = vmatpush2.msra.mxu0 %v109
  %328 = vmatprep.subr.mxu0 0.0
  %329 = vmatpush2.msra.mxu0 %v108
  %330 = vmatprep.subr.mxu0 0.0
  %331 = vmatpush2.msra.mxu0 %v107
  %332 = vmatprep.subr.mxu0 0.0
  %333 = vmatpush2.msra.mxu0 %v106
  %334 = vmatprep.subr.mxu0 0.0
  %335 = vmatpush2.msra.mxu0 %v105
  %336 = vmatprep.subr.mxu0 0.0
  %337 = vmatpush2.msra.mxu0 %v104
  %338 = vmatprep.subr.mxu0 0.0
  %339 = vmatpush2.msra.mxu0 %v103
  %340 = vmatprep.mubr.f32.mxu0 %v180
  %341 = vmatmul.mubr.f32.gmra.mxu0 %v178
  %v342 = vpop.f32.mrf.mxu0
  %v343 = vadd.f32 %v273, %v342
  %v344 = vpop.f32.mrf.mxu0
  %345 = vdwg.mxu0
  %346 = vmatprep.subr.mxu0 0.0
  %347 = vmatpush1.msra.mxu0 %v134
  %348 = vmatprep.subr.mxu0 0.0
  %349 = vmatpush1.msra.mxu0 %v133
  %350 = vmatprep.subr.mxu0 0.0
  %351 = vmatpush1.msra.mxu0 %v132
  %352 = vmatprep.subr.mxu0 0.0
  %353 = vmatpush1.msra.mxu0 %v131
  %354 = vmatprep.subr.mxu0 0.0
  %355 = vmatpush1.msra.mxu0 %v130
  %356 = vmatprep.subr.mxu0 0.0
  %357 = vmatpush1.msra.mxu0 %v129
  %358 = vmatprep.subr.mxu0 0.0
  %359 = vmatpush1.msra.mxu0 %v128
  %360 = vmatprep.subr.mxu0 0.0
  %361 = vmatpush1.msra.mxu0 %v127
  %362 = vmatprep.subr.mxu0 0.0
  %363 = vmatpush1.msra.mxu0 %v126
  %364 = vmatprep.subr.mxu0 0.0
  %365 = vmatpush1.msra.mxu0 %v125
  %366 = vmatprep.subr.mxu0 0.0
  %367 = vmatpush1.msra.mxu0 %v124
  %368 = vmatprep.subr.mxu0 0.0
  %369 = vmatpush1.msra.mxu0 %v123
  %370 = vmatprep.subr.mxu0 0.0
  %371 = vmatpush1.msra.mxu0 %v122
  %372 = vmatprep.subr.mxu0 0.0
  %373 = vmatpush1.msra.mxu0 %v121
  %374 = vmatprep.subr.mxu0 0.0
  %375 = vmatpush1.msra.mxu0 %v120
  %376 = vmatprep.subr.mxu0 0.0
  %377 = vmatpush1.msra.mxu0 %v119
  %378 = vmatprep.subr.mxu0 0.0
  %379 = vmatpush2.msra.mxu0 %v150
  %380 = vmatprep.subr.mxu0 0.0
  %381 = vmatpush2.msra.mxu0 %v149
  %382 = vmatprep.subr.mxu0 0.0
  %383 = vmatpush2.msra.mxu0 %v148
  %384 = vmatprep.subr.mxu0 0.0
  %385 = vmatpush2.msra.mxu0 %v147
  %386 = vmatprep.subr.mxu0 0.0
  %387 = vmatpush2.msra.mxu0 %v146
  %388 = vmatprep.subr.mxu0 0.0
  %389 = vmatpush2.msra.mxu0 %v145
  %390 = vmatprep.subr.mxu0 0.0
  %391 = vmatpush2.msra.mxu0 %v144
  %392 = vmatprep.subr.mxu0 0.0
  %393 = vmatpush2.msra.mxu0 %v143
  %394 = vmatprep.subr.mxu0 0.0
  %395 = vmatpush2.msra.mxu0 %v142
  %396 = vmatprep.subr.mxu0 0.0
  %397 = vmatpush2.msra.mxu0 %v141
  %398 = vmatprep.subr.mxu0 0.0
  %399 = vmatpush2.msra.mxu0 %v140
  %400 = vmatprep.subr.mxu0 0.0
  %401 = vmatpush2.msra.mxu0 %v139
  %402 = vmatprep.subr.mxu0 0.0
  %403 = vmatpush2.msra.mxu0 %v138
  %404 = vmatprep.subr.mxu0 0.0
  %405 = vmatpush2.msra.mxu0 %v137
  %406 = vmatprep.subr.mxu0 0.0
  %407 = vmatpush2.msra.mxu0 %v136
  %408 = vmatprep.subr.mxu0 0.0
  %409 = vmatpush2.msra.mxu0 %v135
  %410 = vmatprep.mubr.f32.mxu0 %v196
  %411 = vmatmul.mubr.f32.gmra.mxu0 %v188
  %v412 = vpop.f32.mrf.mxu0
  %v413 = vadd.f32 %v343, %v412
  %v414 = vpop.f32.mrf.mxu0
  %415 = vdwg.mxu0
  %416 = vmatprep.subr.mxu0 0.0
  %417 = vmatpush1.msra.mxu0 0.0
  %418 = vmatprep.subr.mxu0 0.0
  %419 = vmatpush1.msra.mxu0 0.0
  %420 = vmatprep.subr.mxu0 0.0
  %421 = vmatpush1.msra.mxu0 0.0
  %422 = vmatprep.subr.mxu0 0.0
  %423 = vmatpush1.msra.mxu0 0.0
  %424 = vmatprep.subr.mxu0 0.0
  %425 = vmatpush1.msra.mxu0 0.0
  %426 = vmatprep.subr.mxu0 0.0
  %427 = vmatpush1.msra.mxu0 0.0
  %428 = vmatprep.subr.mxu0 0.0
  %429 = vmatpush1.msra.mxu0 0.0
  %430 = vmatprep.subr.mxu0 0.0
  %431 = vmatpush1.msra.mxu0 0.0
  %432 = vmatprep.subr.mxu0 0.0
  %433 = vmatpush1.msra.mxu0 0.0
  %434 = vmatprep.subr.mxu0 0.0
  %435 = vmatpush1.msra.mxu0 0.0
  %436 = vmatprep.subr.mxu0 0.0
  %437 = vmatpush1.msra.mxu0 0.0
  %438 = vmatprep.subr.mxu0 0.0
  %439 = vmatpush1.msra.mxu0 0.0
  %440 = vmatprep.subr.mxu0 0.0
  %441 = vmatpush1.msra.mxu0 %v154
  %442 = vmatprep.subr.mxu0 0.0
  %443 = vmatpush1.msra.mxu0 %v153
  %444 = vmatprep.subr.mxu0 0.0
  %445 = vmatpush1.msra.mxu0 %v152
  %446 = vmatprep.subr.mxu0 0.0
  %447 = vmatpush1.msra.mxu0 %v151
  %448 = vmatprep.subr.mxu0 0.0
  %449 = vmatpush2.msra.mxu0 0.0
  %450 = vmatprep.subr.mxu0 0.0
  %451 = vmatpush2.msra.mxu0 0.0
  %452 = vmatprep.subr.mxu0 0.0
  %453 = vmatpush2.msra.mxu0 0.0
  %454 = vmatprep.subr.mxu0 0.0
  %455 = vmatpush2.msra.mxu0 0.0
  %456 = vmatprep.subr.mxu0 0.0
  %457 = vmatpush2.msra.mxu0 0.0
  %458 = vmatprep.subr.mxu0 0.0
  %459 = vmatpush2.msra.mxu0 0.0
  %460 = vmatprep.subr.mxu0 0.0
  %461 = vmatpush2.msra.mxu0 0.0
  %462 = vmatprep.subr.mxu0 0.0
  %463 = vmatpush2.msra.mxu0 0.0
  %464 = vmatprep.subr.mxu0 0.0
  %465 = vmatpush2.msra.mxu0 0.0
  %466 = vmatprep.subr.mxu0 0.0
  %467 = vmatpush2.msra.mxu0 0.0
  %468 = vmatprep.subr.mxu0 0.0
  %469 = vmatpush2.msra.mxu0 0.0
  %470 = vmatprep.subr.mxu0 0.0
  %471 = vmatpush2.msra.mxu0 0.0
  %472 = vmatprep.subr.mxu0 0.0
  %473 = vmatpush2.msra.mxu0 0.0
  %474 = vmatprep.subr.mxu0 0.0
  %475 = vmatpush2.msra.mxu0 0.0
  %476 = vmatprep.subr.mxu0 0.0
  %477 = vmatpush2.msra.mxu0 0.0
  %478 = vmatprep.subr.mxu0 0.0
  %479 = vmatpush2.msra.mxu0 0.0
  %480 = vmatprep.mubr.f32.mxu0 0.0
  %481 = vmatmul.mubr.f32.gmra.mxu0 %v204
  %v482 = vpop.f32.mrf.mxu0
  %v483 = vadd.f32 %v413, %v482
  %v484 = vpop.f32.mrf.mxu0
  %485 = vdwg.mxu0
  %vm486 = vcmask 402432
  %v487 = vsel %vm486, %v483, 0.0
  %488 = vadd.xlane.f32.xlu0 %v487
  %v489 = vpop.xlane.xlu0 %488
  %v490 = vrcp.pop 50.0
  %v491 = vmul.f32 %v489, %v490
  %v492 = vsub.f32 %v483, %v491
  %v493 = vmul.f32 %v492, %v492
  %v494 = vsel %vm486, %v493, 0.0
  %495 = vadd.xlane.f32.xlu0 %v494
  %v496 = vpop.xlane.xlu0 %495
  %v497 = vmul.f32 %v496, %v490
  %v498 = vadd.f32 %v497, 1e-05
  %v499 = vrsqrt.pop %v498
  %v500 = vmul.f32 %v492, %v499
  %v501 = vld [vmem:[%s3] sm:$0x1]
  %v503 = vlaneseq
  %v504 = vshrl.u32 %v503, 7
  %v505 = vsub.s32 0, %v504
  %v506 = vrot.slane %v501, %v505
  %v508 = vmul.f32 %v500, %v506
  %v509 = vld [vmem:[%s4] sm:$0x1]
  %v511 = vlaneseq
  %v512 = vshrl.u32 %v511, 7
  %v513 = vsub.s32 0, %v512
  %v514 = vrot.slane %v509, %v513
  %v516 = vadd.f32 %v508, %v514
  %v517 = vtanh.pop %v516
  %v518 = vld [vmem:[%s5] sm:$0xff]
  %v519 = vld [vmem:[%s5 + $0x8] sm:$0xff]
  %v520 = vld [vmem:[%s5 + $0x10] sm:$0xff]
  %v521 = vld [vmem:[%s5 + $0x18] sm:$0xff]
  %v522 = vld [vmem:[%s5 + $0x20] sm:$0xff]
  %v523 = vld [vmem:[%s5 + $0x28] sm:$0xff]
  %v524 = vld [vmem:[%s5 + $0x30] sm:$0xff]
  %v525 = vld [vmem:[%s5 + $0x38] sm:$0xff]
  %v526 = vld [vmem:[%s5 + $0x40] sm:$0xff]
  %v527 = vld [vmem:[%s5 + $0x48] sm:$0xff]
  %v528 = vld [vmem:[%s5 + $0x50] sm:$0xff]
  %v529 = vld [vmem:[%s5 + $0x58] sm:$0xff]
  %v530 = vld [vmem:[%s5 + $0x60] sm:$0x3]
  %v531 = vld [vmem:[%s5 + $0x68] sm:$0x3]
  %v532 = vld [vmem:[%s6] sm:$0x3]
  %v534 = vlaneseq
  %v535 = vshrl.u32 %v534, 7
  %v536 = vsub.s32 0, %v535
  %v537 = vrot.slane %v532, %v536
  %v538 = vlaneseq
  %v539 = vshrl.u32 %v538, 7
  %v540 = vsub.s32 1, %v539
  %v541 = vrot.slane %v532, %v540
  %vm544 = vcmask 408576
  %v546 = vsel %vm544, %v517, 0
  %vm548 = vcmask 1041408
  %v550 = vsel %vm548, %v530, 0
  %v553 = vsel %vm548, %v531, 0
  %555 = vmatprep.subr.mxu0 0.0
  %556 = vmatpush1.msra.mxu0 0.0
  %557 = vmatprep.subr.mxu0 0.0
  %558 = vmatpush1.msra.mxu0 0.0
  %559 = vmatprep.subr.mxu0 0.0
  %560 = vmatpush1.msra.mxu0 0.0
  %561 = vmatprep.subr.mxu0 0.0
  %562 = vmatpush1.msra.mxu0 0.0
  %563 = vmatprep.subr.mxu0 0.0
  %564 = vmatpush1.msra.mxu0 0.0
  %565 = vmatprep.subr.mxu0 0.0
  %566 = vmatpush1.msra.mxu0 0.0
  %567 = vmatprep.subr.mxu0 0.0
  %568 = vmatpush1.msra.mxu0 0.0
  %569 = vmatprep.subr.mxu0 0.0
  %570 = vmatpush1.msra.mxu0 0.0
  %571 = vmatprep.subr.mxu0 0.0
  %572 = vmatpush1.msra.mxu0 0.0
  %573 = vmatprep.subr.mxu0 %v553
  %574 = vmatpush1.msra.mxu0 %v550
  %575 = vmatprep.subr.mxu0 %v529
  %576 = vmatpush1.msra.mxu0 %v528
  %577 = vmatprep.subr.mxu0 %v527
  %578 = vmatpush1.msra.mxu0 %v526
  %579 = vmatprep.subr.mxu0 %v525
  %580 = vmatpush1.msra.mxu0 %v524
  %581 = vmatprep.subr.mxu0 %v523
  %582 = vmatpush1.msra.mxu0 %v522
  %583 = vmatprep.subr.mxu0 %v521
  %584 = vmatpush1.msra.mxu0 %v520
  %585 = vmatprep.subr.mxu0 %v519
  %586 = vmatpush1.msra.mxu0 %v518
  %587 = vmatprep.subr.mxu0 0.0
  %588 = vmatpush2.msra.mxu0 0.0
  %589 = vmatprep.subr.mxu0 0.0
  %590 = vmatpush2.msra.mxu0 0.0
  %591 = vmatprep.subr.mxu0 0.0
  %592 = vmatpush2.msra.mxu0 0.0
  %593 = vmatprep.subr.mxu0 0.0
  %594 = vmatpush2.msra.mxu0 0.0
  %595 = vmatprep.subr.mxu0 0.0
  %596 = vmatpush2.msra.mxu0 0.0
  %597 = vmatprep.subr.mxu0 0.0
  %598 = vmatpush2.msra.mxu0 0.0
  %599 = vmatprep.subr.mxu0 0.0
  %600 = vmatpush2.msra.mxu0 0.0
  %601 = vmatprep.subr.mxu0 0.0
  %602 = vmatpush2.msra.mxu0 0.0
  %603 = vmatprep.subr.mxu0 0.0
  %604 = vmatpush2.msra.mxu0 0.0
  %605 = vmatprep.subr.mxu0 0.0
  %606 = vmatpush2.msra.mxu0 0.0
  %607 = vmatprep.subr.mxu0 0.0
  %608 = vmatpush2.msra.mxu0 0.0
  %609 = vmatprep.subr.mxu0 0.0
  %610 = vmatpush2.msra.mxu0 0.0
  %611 = vmatprep.subr.mxu0 0.0
  %612 = vmatpush2.msra.mxu0 0.0
  %613 = vmatprep.subr.mxu0 0.0
  %614 = vmatpush2.msra.mxu0 0.0
  %615 = vmatprep.subr.mxu0 0.0
  %616 = vmatpush2.msra.mxu0 0.0
  %617 = vmatprep.subr.mxu0 0.0
  %618 = vmatpush2.msra.mxu0 0.0
  %619 = vmatprep.mubr.f32.mxu0 0.0
  %620 = vmatmul.mubr.f32.gmra.mxu0 %v546
  %v621 = vpop.f32.mrf.mxu0
  %v622 = vadd.f32 %v537, %v621
  %v623 = vpop.f32.mrf.mxu0
  %v624 = vadd.f32 %v541, %v623
  %625 = vdwg.mxu0
  %v626 = vmax.f32 %v622, 0.0
  %v627 = vmax.f32 %v624, 0.0
  %v628 = vld [vmem:[%s7] sm:$0xff]
  %v629 = vld [vmem:[%s7 + $0x8] sm:$0xff]
  %v630 = vld [vmem:[%s7 + $0x10] sm:$0xff]
  %v631 = vld [vmem:[%s7 + $0x18] sm:$0xff]
  %v632 = vld [vmem:[%s7 + $0x20] sm:$0xff]
  %v633 = vld [vmem:[%s7 + $0x28] sm:$0xff]
  %v634 = vld [vmem:[%s7 + $0x30] sm:$0xff]
  %v635 = vld [vmem:[%s7 + $0x38] sm:$0xff]
  %v636 = vld [vmem:[%s7 + $0x40] sm:$0xff]
  %v637 = vld [vmem:[%s7 + $0x48] sm:$0xff]
  %v638 = vld [vmem:[%s7 + $0x50] sm:$0xff]
  %v639 = vld [vmem:[%s7 + $0x58] sm:$0xff]
  %v640 = vld [vmem:[%s7 + $0x60] sm:$0xff]
  %v641 = vld [vmem:[%s7 + $0x68] sm:$0xff]
  %v642 = vld [vmem:[%s7 + $0x70] sm:$0xff]
  %v643 = vld [vmem:[%s7 + $0x78] sm:$0xff]
  %v644 = vld [vmem:[%s7 + $0x80] sm:$0xff]
  %v645 = vld [vmem:[%s7 + $0x88] sm:$0xff]
  %v646 = vld [vmem:[%s7 + $0x90] sm:$0xff]
  %v647 = vld [vmem:[%s7 + $0x98] sm:$0xff]
  %v648 = vld [vmem:[%s7 + $0xa0] sm:$0xff]
  %v649 = vld [vmem:[%s7 + $0xa8] sm:$0xff]
  %v650 = vld [vmem:[%s7 + $0xb0] sm:$0xff]
  %v651 = vld [vmem:[%s7 + $0xb8] sm:$0xff]
  %v652 = vld [vmem:[%s7 + $0xc0] sm:$0xff]
  %v653 = vld [vmem:[%s7 + $0xc8] sm:$0xff]
  %v654 = vld [vmem:[%s7 + $0xd0] sm:$0xff]
  %v655 = vld [vmem:[%s7 + $0xd8] sm:$0xff]
  %v656 = vld [vmem:[%s7 + $0xe0] sm:$0xff]
  %v657 = vld [vmem:[%s7 + $0xe8] sm:$0xff]
  %v658 = vld [vmem:[%s7 + $0xf0] sm:$0xff]
  %v659 = vld [vmem:[%s7 + $0xf8] sm:$0xff]
  %v660 = vld [vmem:[%s7 + $0x100] sm:$0xff]
  %v661 = vld [vmem:[%s7 + $0x108] sm:$0xff]
  %v662 = vld [vmem:[%s7 + $0x110] sm:$0xff]
  %v663 = vld [vmem:[%s7 + $0x118] sm:$0xff]
  %v664 = vld [vmem:[%s7 + $0x120] sm:$0xff]
  %v665 = vld [vmem:[%s7 + $0x128] sm:$0xff]
  %v666 = vld [vmem:[%s7 + $0x130] sm:$0xff]
  %v667 = vld [vmem:[%s7 + $0x138] sm:$0xff]
  %v668 = vld [vmem:[%s7 + $0x140] sm:$0xff]
  %v669 = vld [vmem:[%s7 + $0x148] sm:$0xff]
  %v670 = vld [vmem:[%s7 + $0x150] sm:$0xff]
  %v671 = vld [vmem:[%s7 + $0x158] sm:$0xff]
  %v672 = vld [vmem:[%s7 + $0x160] sm:$0xff]
  %v673 = vld [vmem:[%s7 + $0x168] sm:$0xff]
  %v674 = vld [vmem:[%s7 + $0x170] sm:$0xff]
  %v675 = vld [vmem:[%s7 + $0x178] sm:$0xff]
  %v676 = vld [vmem:[%s7 + $0x180] sm:$0xff]
  %v677 = vld [vmem:[%s7 + $0x188] sm:$0xff]
  %v678 = vld [vmem:[%s7 + $0x190] sm:$0xff]
  %v679 = vld [vmem:[%s7 + $0x198] sm:$0xff]
  %v680 = vld [vmem:[%s7 + $0x1a0] sm:$0xff]
  %v681 = vld [vmem:[%s7 + $0x1a8] sm:$0xff]
  %v682 = vld [vmem:[%s7 + $0x1b0] sm:$0xff]
  %v683 = vld [vmem:[%s7 + $0x1b8] sm:$0xff]
  %v684 = vld [vmem:[%s7 + $0x1c0] sm:$0xff]
  %v685 = vld [vmem:[%s7 + $0x1c8] sm:$0xff]
  %v686 = vld [vmem:[%s7 + $0x1d0] sm:$0xff]
  %v687 = vld [vmem:[%s7 + $0x1d8] sm:$0xff]
  %v688 = vld [vmem:[%s7 + $0x1e0] sm:$0xff]
  %v689 = vld [vmem:[%s7 + $0x1e8] sm:$0xff]
  %v690 = vld [vmem:[%s7 + $0x1f0] sm:$0xff]
  %v691 = vld [vmem:[%s7 + $0x1f8] sm:$0xff]
  %v692 = vld [vmem:[%s8] sm:$0x3]
  %v694 = vlaneseq
  %v695 = vshrl.u32 %v694, 7
  %v696 = vsub.s32 0, %v695
  %v697 = vrot.slane %v692, %v696
  %v698 = vlaneseq
  %v699 = vshrl.u32 %v698, 7
  %v700 = vsub.s32 1, %v699
  %v701 = vrot.slane %v692, %v700
  %704 = vmatprep.subr.mxu0 %v659
  %705 = vmatpush1.msra.mxu0 %v658
  %706 = vmatprep.subr.mxu0 %v657
  %707 = vmatpush1.msra.mxu0 %v656
  %708 = vmatprep.subr.mxu0 %v655
  %709 = vmatpush1.msra.mxu0 %v654
  %710 = vmatprep.subr.mxu0 %v653
  %711 = vmatpush1.msra.mxu0 %v652
  %712 = vmatprep.subr.mxu0 %v651
  %713 = vmatpush1.msra.mxu0 %v650
  %714 = vmatprep.subr.mxu0 %v649
  %715 = vmatpush1.msra.mxu0 %v648
  %716 = vmatprep.subr.mxu0 %v647
  %717 = vmatpush1.msra.mxu0 %v646
  %718 = vmatprep.subr.mxu0 %v645
  %719 = vmatpush1.msra.mxu0 %v644
  %720 = vmatprep.subr.mxu0 %v643
  %721 = vmatpush1.msra.mxu0 %v642
  %722 = vmatprep.subr.mxu0 %v641
  %723 = vmatpush1.msra.mxu0 %v640
  %724 = vmatprep.subr.mxu0 %v639
  %725 = vmatpush1.msra.mxu0 %v638
  %726 = vmatprep.subr.mxu0 %v637
  %727 = vmatpush1.msra.mxu0 %v636
  %728 = vmatprep.subr.mxu0 %v635
  %729 = vmatpush1.msra.mxu0 %v634
  %730 = vmatprep.subr.mxu0 %v633
  %731 = vmatpush1.msra.mxu0 %v632
  %732 = vmatprep.subr.mxu0 %v631
  %733 = vmatpush1.msra.mxu0 %v630
  %734 = vmatprep.subr.mxu0 %v629
  %735 = vmatpush1.msra.mxu0 %v628
  %736 = vmatprep.subr.mxu0 %v691
  %737 = vmatpush2.msra.mxu0 %v690
  %738 = vmatprep.subr.mxu0 %v689
  %739 = vmatpush2.msra.mxu0 %v688
  %740 = vmatprep.subr.mxu0 %v687
  %741 = vmatpush2.msra.mxu0 %v686
  %742 = vmatprep.subr.mxu0 %v685
  %743 = vmatpush2.msra.mxu0 %v684
  %744 = vmatprep.subr.mxu0 %v683
  %745 = vmatpush2.msra.mxu0 %v682
  %746 = vmatprep.subr.mxu0 %v681
  %747 = vmatpush2.msra.mxu0 %v680
  %748 = vmatprep.subr.mxu0 %v679
  %749 = vmatpush2.msra.mxu0 %v678
  %750 = vmatprep.subr.mxu0 %v677
  %751 = vmatpush2.msra.mxu0 %v676
  %752 = vmatprep.subr.mxu0 %v675
  %753 = vmatpush2.msra.mxu0 %v674
  %754 = vmatprep.subr.mxu0 %v673
  %755 = vmatpush2.msra.mxu0 %v672
  %756 = vmatprep.subr.mxu0 %v671
  %757 = vmatpush2.msra.mxu0 %v670
  %758 = vmatprep.subr.mxu0 %v669
  %759 = vmatpush2.msra.mxu0 %v668
  %760 = vmatprep.subr.mxu0 %v667
  %761 = vmatpush2.msra.mxu0 %v666
  %762 = vmatprep.subr.mxu0 %v665
  %763 = vmatpush2.msra.mxu0 %v664
  %764 = vmatprep.subr.mxu0 %v663
  %765 = vmatpush2.msra.mxu0 %v662
  %766 = vmatprep.subr.mxu0 %v661
  %767 = vmatpush2.msra.mxu0 %v660
  %768 = vmatprep.mubr.f32.mxu0 %v627
  %769 = vmatmul.mubr.f32.gmra.mxu0 %v626
  %v770 = vpop.f32.mrf.mxu0
  %v771 = vadd.f32 %v697, %v770
  %v772 = vpop.f32.mrf.mxu0
  %v773 = vadd.f32 %v701, %v772
  %774 = vdwg.mxu0
  %v775 = vmax.f32 %v771, 0.0
  %v776 = vmax.f32 %v773, 0.0
  %v777 = vld [vmem:[%s9] sm:$0xff]
  %v778 = vld [vmem:[%s9 + $0x8] sm:$0xff]
  %v779 = vld [vmem:[%s9 + $0x10] sm:$0xff]
  %v780 = vld [vmem:[%s9 + $0x18] sm:$0xff]
  %v781 = vld [vmem:[%s9 + $0x20] sm:$0xff]
  %v782 = vld [vmem:[%s9 + $0x28] sm:$0xff]
  %v783 = vld [vmem:[%s9 + $0x30] sm:$0xff]
  %v784 = vld [vmem:[%s9 + $0x38] sm:$0xff]
  %v785 = vld [vmem:[%s9 + $0x40] sm:$0xff]
  %v786 = vld [vmem:[%s9 + $0x48] sm:$0xff]
  %v787 = vld [vmem:[%s9 + $0x50] sm:$0xff]
  %v788 = vld [vmem:[%s9 + $0x58] sm:$0xff]
  %v789 = vld [vmem:[%s9 + $0x60] sm:$0xff]
  %v790 = vld [vmem:[%s9 + $0x68] sm:$0xff]
  %v791 = vld [vmem:[%s9 + $0x70] sm:$0xff]
  %v792 = vld [vmem:[%s9 + $0x78] sm:$0xff]
  %v793 = vld [vmem:[%s9 + $0x80] sm:$0xff]
  %v794 = vld [vmem:[%s9 + $0x88] sm:$0xff]
  %v795 = vld [vmem:[%s9 + $0x90] sm:$0xff]
  %v796 = vld [vmem:[%s9 + $0x98] sm:$0xff]
  %v797 = vld [vmem:[%s9 + $0xa0] sm:$0xff]
  %v798 = vld [vmem:[%s9 + $0xa8] sm:$0xff]
  %v799 = vld [vmem:[%s9 + $0xb0] sm:$0xff]
  %v800 = vld [vmem:[%s9 + $0xb8] sm:$0xff]
  %v801 = vld [vmem:[%s9 + $0xc0] sm:$0xff]
  %v802 = vld [vmem:[%s9 + $0xc8] sm:$0xff]
  %v803 = vld [vmem:[%s9 + $0xd0] sm:$0xff]
  %v804 = vld [vmem:[%s9 + $0xd8] sm:$0xff]
  %v805 = vld [vmem:[%s9 + $0xe0] sm:$0xff]
  %v806 = vld [vmem:[%s9 + $0xe8] sm:$0xff]
  %v807 = vld [vmem:[%s9 + $0xf0] sm:$0xff]
  %v808 = vld [vmem:[%s9 + $0xf8] sm:$0xff]
  %v809 = vld [vmem:[%s10] sm:$0x1]
  %v811 = vlaneseq
  %v812 = vshrl.u32 %v811, 7
  %v813 = vsub.s32 0, %v812
  %v814 = vrot.slane %v809, %v813
  %816 = vmatprep.subr.mxu0 0.0
  %817 = vmatpush1.msra.mxu0 %v792
  %818 = vmatprep.subr.mxu0 0.0
  %819 = vmatpush1.msra.mxu0 %v791
  %820 = vmatprep.subr.mxu0 0.0
  %821 = vmatpush1.msra.mxu0 %v790
  %822 = vmatprep.subr.mxu0 0.0
  %823 = vmatpush1.msra.mxu0 %v789
  %824 = vmatprep.subr.mxu0 0.0
  %825 = vmatpush1.msra.mxu0 %v788
  %826 = vmatprep.subr.mxu0 0.0
  %827 = vmatpush1.msra.mxu0 %v787
  %828 = vmatprep.subr.mxu0 0.0
  %829 = vmatpush1.msra.mxu0 %v786
  %830 = vmatprep.subr.mxu0 0.0
  %831 = vmatpush1.msra.mxu0 %v785
  %832 = vmatprep.subr.mxu0 0.0
  %833 = vmatpush1.msra.mxu0 %v784
  %834 = vmatprep.subr.mxu0 0.0
  %835 = vmatpush1.msra.mxu0 %v783
  %836 = vmatprep.subr.mxu0 0.0
  %837 = vmatpush1.msra.mxu0 %v782
  %838 = vmatprep.subr.mxu0 0.0
  %839 = vmatpush1.msra.mxu0 %v781
  %840 = vmatprep.subr.mxu0 0.0
  %841 = vmatpush1.msra.mxu0 %v780
  %842 = vmatprep.subr.mxu0 0.0
  %843 = vmatpush1.msra.mxu0 %v779
  %844 = vmatprep.subr.mxu0 0.0
  %845 = vmatpush1.msra.mxu0 %v778
  %846 = vmatprep.subr.mxu0 0.0
  %847 = vmatpush1.msra.mxu0 %v777
  %848 = vmatprep.subr.mxu0 0.0
  %849 = vmatpush2.msra.mxu0 %v808
  %850 = vmatprep.subr.mxu0 0.0
  %851 = vmatpush2.msra.mxu0 %v807
  %852 = vmatprep.subr.mxu0 0.0
  %853 = vmatpush2.msra.mxu0 %v806
  %854 = vmatprep.subr.mxu0 0.0
  %855 = vmatpush2.msra.mxu0 %v805
  %856 = vmatprep.subr.mxu0 0.0
  %857 = vmatpush2.msra.mxu0 %v804
  %858 = vmatprep.subr.mxu0 0.0
  %859 = vmatpush2.msra.mxu0 %v803
  %860 = vmatprep.subr.mxu0 0.0
  %861 = vmatpush2.msra.mxu0 %v802
  %862 = vmatprep.subr.mxu0 0.0
  %863 = vmatpush2.msra.mxu0 %v801
  %864 = vmatprep.subr.mxu0 0.0
  %865 = vmatpush2.msra.mxu0 %v800
  %866 = vmatprep.subr.mxu0 0.0
  %867 = vmatpush2.msra.mxu0 %v799
  %868 = vmatprep.subr.mxu0 0.0
  %869 = vmatpush2.msra.mxu0 %v798
  %870 = vmatprep.subr.mxu0 0.0
  %871 = vmatpush2.msra.mxu0 %v797
  %872 = vmatprep.subr.mxu0 0.0
  %873 = vmatpush2.msra.mxu0 %v796
  %874 = vmatprep.subr.mxu0 0.0
  %875 = vmatpush2.msra.mxu0 %v795
  %876 = vmatprep.subr.mxu0 0.0
  %877 = vmatpush2.msra.mxu0 %v794
  %878 = vmatprep.subr.mxu0 0.0
  %879 = vmatpush2.msra.mxu0 %v793
  %880 = vmatprep.mubr.f32.mxu0 %v776
  %881 = vmatmul.mubr.f32.gmra.mxu0 %v775
  %v882 = vpop.f32.mrf.mxu0
  %v883 = vadd.f32 %v814, %v882
  %v884 = vpop.f32.mrf.mxu0
  %885 = vdwg.mxu0
  %v886 = vld [vmem:[%s11] sm:$0xff]
  %v887 = vld [vmem:[%s11 + $0x8] sm:$0xff]
  %v888 = vld [vmem:[%s11 + $0x10] sm:$0xff]
  %v889 = vld [vmem:[%s11 + $0x18] sm:$0xff]
  %v890 = vld [vmem:[%s11 + $0x20] sm:$0xff]
  %v891 = vld [vmem:[%s11 + $0x28] sm:$0xff]
  %v892 = vld [vmem:[%s11 + $0x30] sm:$0xff]
  %v893 = vld [vmem:[%s11 + $0x38] sm:$0xff]
  %v894 = vld [vmem:[%s11 + $0x40] sm:$0xff]
  %v895 = vld [vmem:[%s11 + $0x48] sm:$0xff]
  %v896 = vld [vmem:[%s11 + $0x50] sm:$0xff]
  %v897 = vld [vmem:[%s11 + $0x58] sm:$0xff]
  %v898 = vld [vmem:[%s11 + $0x60] sm:$0xff]
  %v899 = vld [vmem:[%s11 + $0x68] sm:$0xff]
  %v900 = vld [vmem:[%s11 + $0x70] sm:$0xff]
  %v901 = vld [vmem:[%s11 + $0x78] sm:$0xff]
  %v902 = vld [vmem:[%s11 + $0x80] sm:$0xff]
  %v903 = vld [vmem:[%s11 + $0x88] sm:$0xff]
  %v904 = vld [vmem:[%s11 + $0x90] sm:$0xff]
  %v905 = vld [vmem:[%s11 + $0x98] sm:$0xff]
  %v906 = vld [vmem:[%s11 + $0xa0] sm:$0xff]
  %v907 = vld [vmem:[%s11 + $0xa8] sm:$0xff]
  %v908 = vld [vmem:[%s11 + $0xb0] sm:$0xff]
  %v909 = vld [vmem:[%s11 + $0xb8] sm:$0xff]
  %v910 = vld [vmem:[%s11 + $0xc0] sm:$0xff]
  %v911 = vld [vmem:[%s11 + $0xc8] sm:$0xff]
  %v912 = vld [vmem:[%s11 + $0xd0] sm:$0xff]
  %v913 = vld [vmem:[%s11 + $0xd8] sm:$0xff]
  %v914 = vld [vmem:[%s11 + $0xe0] sm:$0xff]
  %v915 = vld [vmem:[%s11 + $0xe8] sm:$0xff]
  %v916 = vld [vmem:[%s11 + $0xf0] sm:$0xff]
  %v917 = vld [vmem:[%s11 + $0xf8] sm:$0xff]
  %v918 = vld [vmem:[%s12] sm:$0x1]
  %v920 = vlaneseq
  %v921 = vshrl.u32 %v920, 7
  %v922 = vsub.s32 0, %v921
  %v923 = vrot.slane %v918, %v922
  %925 = vmatprep.subr.mxu0 0.0
  %926 = vmatpush1.msra.mxu0 %v901
  %927 = vmatprep.subr.mxu0 0.0
  %928 = vmatpush1.msra.mxu0 %v900
  %929 = vmatprep.subr.mxu0 0.0
  %930 = vmatpush1.msra.mxu0 %v899
  %931 = vmatprep.subr.mxu0 0.0
  %932 = vmatpush1.msra.mxu0 %v898
  %933 = vmatprep.subr.mxu0 0.0
  %934 = vmatpush1.msra.mxu0 %v897
  %935 = vmatprep.subr.mxu0 0.0
  %936 = vmatpush1.msra.mxu0 %v896
  %937 = vmatprep.subr.mxu0 0.0
  %938 = vmatpush1.msra.mxu0 %v895
  %939 = vmatprep.subr.mxu0 0.0
  %940 = vmatpush1.msra.mxu0 %v894
  %941 = vmatprep.subr.mxu0 0.0
  %942 = vmatpush1.msra.mxu0 %v893
  %943 = vmatprep.subr.mxu0 0.0
  %944 = vmatpush1.msra.mxu0 %v892
  %945 = vmatprep.subr.mxu0 0.0
  %946 = vmatpush1.msra.mxu0 %v891
  %947 = vmatprep.subr.mxu0 0.0
  %948 = vmatpush1.msra.mxu0 %v890
  %949 = vmatprep.subr.mxu0 0.0
  %950 = vmatpush1.msra.mxu0 %v889
  %951 = vmatprep.subr.mxu0 0.0
  %952 = vmatpush1.msra.mxu0 %v888
  %953 = vmatprep.subr.mxu0 0.0
  %954 = vmatpush1.msra.mxu0 %v887
  %955 = vmatprep.subr.mxu0 0.0
  %956 = vmatpush1.msra.mxu0 %v886
  %957 = vmatprep.subr.mxu0 0.0
  %958 = vmatpush2.msra.mxu0 %v917
  %959 = vmatprep.subr.mxu0 0.0
  %960 = vmatpush2.msra.mxu0 %v916
  %961 = vmatprep.subr.mxu0 0.0
  %962 = vmatpush2.msra.mxu0 %v915
  %963 = vmatprep.subr.mxu0 0.0
  %964 = vmatpush2.msra.mxu0 %v914
  %965 = vmatprep.subr.mxu0 0.0
  %966 = vmatpush2.msra.mxu0 %v913
  %967 = vmatprep.subr.mxu0 0.0
  %968 = vmatpush2.msra.mxu0 %v912
  %969 = vmatprep.subr.mxu0 0.0
  %970 = vmatpush2.msra.mxu0 %v911
  %971 = vmatprep.subr.mxu0 0.0
  %972 = vmatpush2.msra.mxu0 %v910
  %973 = vmatprep.subr.mxu0 0.0
  %974 = vmatpush2.msra.mxu0 %v909
  %975 = vmatprep.subr.mxu0 0.0
  %976 = vmatpush2.msra.mxu0 %v908
  %977 = vmatprep.subr.mxu0 0.0
  %978 = vmatpush2.msra.mxu0 %v907
  %979 = vmatprep.subr.mxu0 0.0
  %980 = vmatpush2.msra.mxu0 %v906
  %981 = vmatprep.subr.mxu0 0.0
  %982 = vmatpush2.msra.mxu0 %v905
  %983 = vmatprep.subr.mxu0 0.0
  %984 = vmatpush2.msra.mxu0 %v904
  %985 = vmatprep.subr.mxu0 0.0
  %986 = vmatpush2.msra.mxu0 %v903
  %987 = vmatprep.subr.mxu0 0.0
  %988 = vmatpush2.msra.mxu0 %v902
  %989 = vmatprep.mubr.f32.mxu0 %v776
  %990 = vmatmul.mubr.f32.gmra.mxu0 %v775
  %v991 = vpop.f32.mrf.mxu0
  %v992 = vadd.f32 %v923, %v991
  %v993 = vpop.f32.mrf.mxu0
  %994 = vdwg.mxu0
  %v995 = vtanh.pop %v992
  %v996 = vadd.f32 %v995, 1.0
  %v997 = vmul.f32 %v996, 6.0
  %v998 = vadd.f32 %v997, -10.0
  %v999 = vmul.f32 %v998, 1.442695
  %v1000 = vpow.pop %v999
  %v1001 = vld [vmem:[%s13] sm:$0x3]
  %v1002 = vmul.f32 %v1000, %v1001
  %v1003 = vadd.f32 %v883, %v1002
  %v1004 = vtanh.pop %v1003
  %v1005 = vld [vmem:[%s14] sm:$0x1]
  %v1007 = vlaneseq
  %v1008 = vshrl.u32 %v1007, 7
  %v1009 = vsub.s32 0, %v1008
  %v1010 = vrot.slane %v1005, %v1009
  %v1012 = vmul.f32 %v1004, %v1010
  %v1013 = vld [vmem:[%s15] sm:$0x1]
  %v1015 = vlaneseq
  %v1016 = vshrl.u32 %v1015, 7
  %v1017 = vsub.s32 0, %v1016
  %v1018 = vrot.slane %v1013, %v1017
  %v1020 = vadd.f32 %v1012, %v1018
  %v1021 = vmul.f32 %v1001, -0.5
  %v1022 = vmul.f32 %v1021, %v1001
  %v1023 = vsub.f32 %v1022, %v998
  %v1024 = vsub.f32 %v1023, 0.9189385
  %v1025 = vmul.f32 %v1004, %v1004
  %v1026 = vsub.f32 1.0, %v1025
  %v1027 = vmul.f32 %v1010, %v1026
  %v1028 = vadd.f32 %v1027, 1e-06
  %v1029 = vlog2.pop %v1028
  %v1030 = vmul.f32 %v1029, 0.6931472
  %v1031 = vsub.f32 %v1024, %v1030
  %vm1032 = vcmask 41984
  %v1033 = vsel %vm1032, %v1031, 0.0
  %1034 = vadd.xlane.f32.xlu0 %v1033
  %v1035 = vpop.xlane.xlu0 %1034
  %vm1036 = vcmask 48128
  %v1037 = vsel %vm1036, %v1020, %v1035
  %vm1038 = vcmask 56320
  %v1039 = vsel %vm1038, %v1037, 0.0
  %1040 = vst [vmem:[%s16] sm:$0x3] %v1039
  // Predicated region
  $region66: #{sac_ae_actor_forward.3} parent=0 // pred_check
    _
  $region67: #{sac_ae_actor_forward.3} parent=0 // pred_check_branch
    %1042 = sbr.rel (0) target = $region69
  $region68: #{sac_ae_actor_forward.3} parent=0 // pred_region
    _
  $region69: #{sac_ae_actor_forward.3} parent=0 // pred_fallthru
    _
  // Predicated region
  $region70: #{sac_ae_actor_forward.3} parent=0 // pred_check
    _
  $region71: #{sac_ae_actor_forward.3} parent=0 // pred_check_branch
    %1044 = sbr.rel (0) target = $region73
  $region72: #{sac_ae_actor_forward.3} parent=0 // pred_region
    _
  $region73: #{sac_ae_actor_forward.3} parent=0 // pred_fallthru
    _

</llo_original>
